<compile_context>
chip_gen: v7x
topology: tpu7x:2x2x1
jax: 0.10.0
libtpu: 0.0.40
codegen_flags: <defaults>
</compile_context>

<pallas_src>
import functools
import numpy as np

import jax
import jax.numpy as jnp
from jax.experimental import pallas as pl
from jax.experimental.pallas import tpu as pltpu


_SQRT_2_OVER_PI = 0.7978845608028654


def _gelu(x):
    # TODO(synk): nn.GELU() default is exact erf-GELU; erf has no clean Mosaic
    # lowering, so the tanh approximation is used (max abs err ~1e-3).
    return 0.5 * x * (1.0 + jnp.tanh(_SQRT_2_OVER_PI * (x + 0.044715 * x * x * x)))


def _round_up(n, m):
    return ((n + m - 1) // m) * m


def _pad_to(n, big_tile, small=8):
    """Pad count n so it is a multiple of 8 (small) or of the big tile."""
    return _round_up(n, small) if n <= big_tile else _round_up(n, big_tile)


def _node_tile(n):
    return n if n <= 128 else 128


def _edge_tile(e):
    return e if e <= 256 else 256


# ----------------------------- Pallas kernels -----------------------------

def _transform_kernel(x_ref, w_ref, o_ref, *, use_bf16):
    """t = x @ [W_0 | ... | W_{K-1} | W_root]   (one MXU pass, 256 output lanes)."""
    x = x_ref[...]
    w = w_ref[...]
    if use_bf16:                       # bf16 operands, f32 accumulation (v6e/v7x MXU)
        x = x.astype(jnp.bfloat16)
        w = w.astype(jnp.bfloat16)
    o_ref[...] = jnp.dot(x, w, preferred_element_type=jnp.float32)


def _edge_message_kernel(tj_ref, ea_ref, em_ref, o_ref, *, K, M):
    """Linear open B-spline (kernel_size=K, degree=1, dim=1) message weighting.

    tj: [te, K*M] gathered transformed source features; ea: [te,1] pseudo in [0,1];
    em: [te,1] edge validity mask.  out: [te, M]  msg = sum_k B_k(ea) * tj[:, kM:(k+1)M].
    """
    pos = ea_ref[...] * jnp.float32(K - 1)                 # [te, 1]
    tj = tj_ref[...]
    acc = jnp.zeros((tj.shape[0], M), jnp.float32)
    for k in range(K):                                     # hat basis B_k = max(0, 1-|pos-k|)
        bk = jnp.maximum(0.0, 1.0 - jnp.abs(pos - jnp.float32(k)))
        acc = acc + bk * tj[:, k * M:(k + 1) * M]
    o_ref[...] = acc * em_ref[...]                         # mask padded / filtered edges


def _node_epilogue_kernel(agg_ref, deg_ref, root_ref, bias_ref, wpool_ref,
                          y_ref, s_ref):
    """Fused: mean-aggregate + root + bias -> GELU -> TopKPooling score.

    agg:[tn,M] scatter-summed messages, deg:[tn,1] valid in-degree,
    root:[tn,M] x@W_root, bias:[1,M], wpool:[1,M].  y:[tn,M], s:[tn,1].
    """
    inv_deg = pl.reciprocal(jnp.maximum(deg_ref[...], 1.0), approx=True)  # EUP
    h = agg_ref[...] * inv_deg + root_ref[...] + bias_ref[...]
    y = _gelu(h)
    y_ref[...] = y
    w = wpool_ref[...]                                                    # [1, M]
    inv_norm = jax.lax.rsqrt(jnp.sum(w * w, axis=1, keepdims=True))       # [1, 1]
    s_ref[...] = jnp.tanh(jnp.sum(y * w, axis=1, keepdims=True) * inv_norm)


def _readout_kernel(x_ref, mask_ref, o_ref, *, B, F):
    """[global_max_pool | global_mean_pool] per graph, masked.

    x:[N,F], mask:[N,B] (one_hot(batch)*node_mask) -> out:[B,2F] single store.
    """
    x = x_ref[...]
    m = mask_ref[...]
    rows = []
    for b in range(B):
        mb = m[:, b:b + 1]                                              # [N, 1]
        cnt = jnp.sum(mb, axis=0, keepdims=True)                        # [1, 1]
        sm = jnp.sum(mb * x, axis=0, keepdims=True)                     # [1, F]
        mean = sm * pl.reciprocal(jnp.maximum(cnt, 1.0), approx=True)
        mx = jnp.max(jnp.where(mb > 0.5, x, jnp.float32(-3.0e38)),
                     axis=0, keepdims=True)                             # [1, F]
        mx = jnp.where(cnt > 0.0, mx, 0.0)                              # empty-graph guard
        rows.append(jnp.concatenate([mx, mean], axis=1))                # [1, 2F]
    o_ref[...] = jnp.concatenate(rows, axis=0)                          # one lane-dense store


def _head_kernel(r1_ref, r2_ref, r3_ref, r4_ref,
                 w1_ref, b1_ref, w2_ref, b2_ref, w3_ref, b3_ref, o_ref):
    """x = x1+x2+x3+x4; GELU(lin1) -> GELU(lin2) -> lin3 (fused, one launch)."""
    x = r1_ref[...] + r2_ref[...] + r3_ref[...] + r4_ref[...]
    h = _gelu(jnp.dot(x, w1_ref[...], preferred_element_type=jnp.float32) + b1_ref[...])
    h = _gelu(jnp.dot(h, w2_ref[...], preferred_element_type=jnp.float32) + b2_ref[...])
    o_ref[...] = jnp.dot(h, w3_ref[...], preferred_element_type=jnp.float32) + b3_ref[...]


# ------------------------------ kernel wrappers ------------------------------

def spline_transform(x, w_cat):
    N, Fin = x.shape
    Kout = w_cat.shape[1]
    tn = _node_tile(N)
    use_bf16 = (Fin % 8 == 0) and (Fin >= 8)
    kern = functools.partial(_transform_kernel, use_bf16=use_bf16)
    return pl.pallas_call(
        kern,
        grid=(N // tn,),
        in_specs=[pl.BlockSpec((tn, Fin), lambda i: (i, 0)),
                  pl.BlockSpec((Fin, Kout), lambda i: (0, 0))],
        out_specs=pl.BlockSpec((tn, Kout), lambda i: (i, 0)),
        out_shape=jax.ShapeDtypeStruct((N, Kout), jnp.float32),
        compiler_params=pltpu.CompilerParams(dimension_semantics=("parallel",)),
    )(x, w_cat)


def edge_messages(tj, edge_attr, edge_mask, K, M):
    E = tj.shape[0]
    te = _edge_tile(E)
    kern = functools.partial(_edge_message_kernel, K=K, M=M)
    return pl.pallas_call(
        kern,
        grid=(E // te,),
        in_specs=[pl.BlockSpec((te, K * M), lambda i: (i, 0)),
                  pl.BlockSpec((te, 1), lambda i: (i, 0)),
                  pl.BlockSpec((te, 1), lambda i: (i, 0))],
        out_specs=pl.BlockSpec((te, M), lambda i: (i, 0)),
        out_shape=jax.ShapeDtypeStruct((E, M), jnp.float32),
        compiler_params=pltpu.CompilerParams(dimension_semantics=("parallel",)),
    )(tj, edge_attr, edge_mask)


def node_epilogue(agg, deg, root_part, bias, wpool):
    N, M = agg.shape
    tn = _node_tile(N)
    return pl.pallas_call(
        _node_epilogue_kernel,
        grid=(N // tn,),
        in_specs=[pl.BlockSpec((tn, M), lambda i: (i, 0)),
                  pl.BlockSpec((tn, 1), lambda i: (i, 0)),
                  pl.BlockSpec((tn, M), lambda i: (i, 0)),
                  pl.BlockSpec((1, M), lambda i: (0, 0)),
                  pl.BlockSpec((1, M), lambda i: (0, 0))],
        out_specs=(pl.BlockSpec((tn, M), lambda i: (i, 0)),
                   pl.BlockSpec((tn, 1), lambda i: (i, 0))),
        out_shape=(jax.ShapeDtypeStruct((N, M), jnp.float32),
                   jax.ShapeDtypeStruct((N, 1), jnp.float32)),
        compiler_params=pltpu.CompilerParams(dimension_semantics=("parallel",)),
    )(agg, deg, root_part, bias, wpool)


def graph_readout(x, gmask, B):
    N, F = x.shape
    kern = functools.partial(_readout_kernel, B=B, F=F)
    return pl.pallas_call(
        kern,
        out_shape=jax.ShapeDtypeStruct((B, 2 * F), jnp.float32),
    )(x, gmask)


def mlp_head(readouts, p):
    r1, r2, r3, r4 = readouts
    Bg = r1.shape[0]
    C = p["w3"].shape[1]
    return pl.pallas_call(
        _head_kernel,
        out_shape=jax.ShapeDtypeStruct((Bg, C), jnp.float32),
    )(r1, r2, r3, r4, p["w1"], p["b1"], p["w2"], p["b2"], p["w3"], p["b3"])


# ---------------------- on-device TopK selection (static shapes) ----------------------

def topk_keep(score, node_mask, batch, num_graphs, ratio):
    """Keep top ceil(ratio * n_b) valid nodes per graph (stable, descending).

    Fully vectorized / static-shape: no host sync.
    TODO(synk): O(N^2) pairwise ranking; swap for per-graph lax.top_k for very large N.
    """
    N = score.shape[0]
    valid = node_mask > 0.5
    s = jnp.where(valid, score, jnp.float32(-1e30))
    idx = jnp.arange(N, dtype=jnp.int32)
    same_graph = batch[:, None] == batch[None, :]
    better = (s[None, :] > s[:, None]) | \
             ((s[None, :] == s[:, None]) & (idx[None, :] < idx[:, None]))
    rank = jnp.sum(jnp.where(same_graph & valid[None, :] & better, 1.0, 0.0), axis=1)
    cnt = jax.ops.segment_sum(node_mask, batch, num_segments=num_graphs)   # [B]
    k = jnp.ceil(jnp.float32(ratio) * cnt)                                 # [B]
    keep = valid & (rank < k[batch])
    return keep.astype(jnp.float32)


# ------------------------------ full forward ------------------------------

def recognizer_spl_forward(params, data_x, fields, src, dst, edge_attr, batch,
                           node_mask, edge_mask, *, num_graphs):
    ratio = 0.8
    B = num_graphs
    N = data_x.shape[0]

    x = jnp.concatenate([data_x[:, :3], fields], axis=-1)      # cat coords + fields
    nm = node_mask                                             # [N] node validity
    em = edge_mask                                             # [E,1] edge validity

    readouts = []
    for l in range(1, 5):
        cp = params[f"conv{l}"]
        pw = params[f"pool{l}"]
        M = cp["bias"].shape[1]
        K = cp["w_cat"].shape[1] // M - 1

        # ---- SplineConv (aggr='mean', root, bias) + GELU + TopK score (Pallas) ----
        t_all = spline_transform(x, cp["w_cat"])               # [N, K*M + M]
        tj = jnp.take(t_all[:, :K * M], src, axis=0)           # gather x_j transform [E, K*M]
        msg = edge_messages(tj, edge_attr, em, K, M)           # [E, M]
        # TODO(synk): data-dependent scatter-add stays in XLA (segment_sum); no
        # static-shape Pallas scatter without per-edge serial loops / edge sorting.
        agg = jax.ops.segment_sum(msg, dst, num_segments=N)    # [N, M]
        deg = jax.ops.segment_sum(em, dst, num_segments=N)     # [N, 1] valid in-degree
        y, score = node_epilogue(agg, deg, t_all[:, K * M:], cp["bias"], pw)

        # ---- TopKPooling(ratio=0.8): masked selection, x *= tanh-score ----
        keep = topk_keep(score[:, 0], nm, batch, B, ratio)     # [N] in {0,1}
        x = y * (score * keep[:, None])
        nm = keep
        em = em * keep[src][:, None] * keep[dst][:, None]

        # ---- readout [gmp | gap] on the pooled graph ----
        gmask = jax.nn.one_hot(batch, B, dtype=jnp.float32) * nm[:, None]   # [N, B]
        readouts.append(graph_readout(x, gmask, B))            # [B, 2M]

    return mlp_head(readouts, params)                          # x1+x2+x3+x4 -> MLP


# --------------------------- parameter init ---------------------------

def init_params(key, planes, hidden=64, K=3):
    keys = iter(jax.random.split(key, 64))

    def nrm(shape, scale=0.1):
        return scale * jax.random.normal(next(keys), shape, dtype=jnp.float32)

    params = {}
    ins = [planes[0], hidden, hidden, hidden]
    for i, cin in enumerate(ins, start=1):
        params[f"conv{i}"] = dict(
            w_cat=nrm((cin, K * hidden + hidden)),   # [W_0 | W_1 | W_2 | W_root]
            bias=nrm((1, hidden)),
        )
        params[f"pool{i}"] = nrm((1, hidden))
    params["w1"] = nrm((2 * hidden, hidden)); params["b1"] = nrm((1, hidden))
    params["w2"] = nrm((hidden, hidden));     params["b2"] = nrm((1, hidden))
    params["w3"] = nrm((hidden, planes[-1])); params["b3"] = nrm((1, planes[-1]))
    return params


# -------------------------------- main --------------------------------

if __name__ == "__main__":
    planes = [4, 3]                 # planes[0] = 3 coords + 1 field channel; 3 output classes
    hidden = 64
    key = jax.random.PRNGKey(0)
    kp, kx, kf, ke = jax.random.split(key, 4)
    params = init_params(kp, planes, hidden=hidden, K=3)

    B = 2
    nodes_per_graph = 16
    N = B * nodes_per_graph

    # two ring-ish graphs (±1, ±2 neighbors, both directions) + self-loops
    src_l, dst_l = [], []
    for b in range(B):
        off = b * nodes_per_graph
        for i in range(nodes_per_graph):
            for d in (1, 2):
                j = (i + d) % nodes_per_graph
                src_l += [off + i, off + j]
                dst_l += [off + j, off + i]
            src_l.append(off + i)
            dst_l.append(off + i)
    src = np.array(src_l, dtype=np.int32)
    dst = np.array(dst_l, dtype=np.int32)
    E = src.shape[0]
    batch = np.repeat(np.arange(B), nodes_per_graph).astype(np.int32)

    data_x = np.asarray(jax.random.normal(kx, (N, 3), dtype=jnp.float32))
    fields = np.asarray(jax.random.normal(kf, (N, planes[0] - 3), dtype=jnp.float32))
    edge_attr = np.asarray(jax.random.uniform(ke, (E, 1), dtype=jnp.float32))  # pseudo in [0,1]

    # ---- pad to static, tile-friendly shapes; track validity with masks ----
    N_pad = _pad_to(N, 128)
    E_pad = _pad_to(E, 256)

    def pad_rows(a, n):
        a = np.asarray(a)
        if a.shape[0] >= n:
            return a
        widths = [(0, n - a.shape[0])] + [(0, 0)] * (a.ndim - 1)
        return np.pad(a, widths)

    node_mask = np.zeros((N_pad,), np.float32); node_mask[:N] = 1.0
    edge_mask = np.zeros((E_pad, 1), np.float32); edge_mask[:E] = 1.0

    data_x_p = pad_rows(data_x, N_pad)
    fields_p = pad_rows(fields, N_pad)
    batch_p = pad_rows(batch, N_pad)
    src_p = pad_rows(src, E_pad)
    dst_p = pad_rows(dst, E_pad)
    edge_attr_p = pad_rows(edge_attr, E_pad)

    fwd = jax.jit(recognizer_spl_forward, static_argnames=("num_graphs",))
    out = fwd(params,
              jnp.asarray(data_x_p), jnp.asarray(fields_p),
              jnp.asarray(src_p), jnp.asarray(dst_p), jnp.asarray(edge_attr_p),
              jnp.asarray(batch_p), jnp.asarray(node_mask), jnp.asarray(edge_mask),
              num_graphs=B)
    out = jax.block_until_ready(out)

    assert out.shape == (B, planes[-1]) and out.dtype == jnp.float32
    assert bool(jnp.all(jnp.isfinite(out)))
    print("KERNEL_OK")
</pallas_src>

<mosaic_0001>
module attributes {stable_mosaic.version = 11 : i64} {
  func.func private @main(%arg0: i32) attributes {dimension_semantics = [#tpu.dimension_semantics<core_parallel>], iteration_bounds = array<i64: 2>, tpu.core_type = #tpu.core_type<sc_scalar_subcore>, window_params = []} {
    return
  }
}

module attributes {stable_mosaic.version = 11 : i64} {
  func.func private @main(%arg0: i32) attributes {dimension_semantics = [#tpu.dimension_semantics<core_parallel>], iteration_bounds = array<i64: 2>, tpu.core_type = #tpu.core_type<sc_scalar_subcore>, window_params = []} {
    return
  }
}

module attributes {stable_mosaic.version = 11 : i64} {
  func.func @_transform_kernel(%arg0: i32, %arg1: memref<32x4xf32, #tpu.memory_space<vmem>>, %arg2: memref<4x256xf32, #tpu.memory_space<vmem>>, %arg3: memref<32x256xf32, #tpu.memory_space<vmem>>) attributes {dimension_semantics = [#tpu.dimension_semantics<parallel>], iteration_bounds = array<i64: 1>, scalar_prefetch = 0 : i64, scratch_operands = 0 : i64, tpu.core_type = #tpu.core_type<tc>, window_params = [{transform_indices = @transform_0, window_bounds = array<i64: 32, 4>}, {pipeline_mode = #tpu.pipeline_mode<synchronous>, transform_indices = @transform_1, window_bounds = array<i64: 4, 256>}, {transform_indices = @transform_2, window_bounds = array<i64: 32, 256>}]} {
    %c0 = arith.constant 0 : index
    %c0_0 = arith.constant 0 : index
    %0 = vector.load %arg1[%c0, %c0_0] : memref<32x4xf32, #tpu.memory_space<vmem>>, vector<32x4xf32>
    %c0_1 = arith.constant 0 : index
    %c0_2 = arith.constant 0 : index
    %1 = vector.load %arg2[%c0_1, %c0_2] : memref<4x256xf32, #tpu.memory_space<vmem>>, vector<4x256xf32>
    %cst = arith.constant dense<0.000000e+00> : vector<32x256xf32>
    %2 = tpu.matmul %0, %1, %cst {dimension_numbers = #tpu.dot_dimension_numbers<[1], [0], [0], [1], [0, 0, 1, 1], [], []>} : vector<32x4xf32>, vector<4x256xf32>, vector<32x256xf32> -> vector<32x256xf32>
    %c0_3 = arith.constant 0 : index
    %c0_4 = arith.constant 0 : index
    %3 = vector.load %arg3[%c0_3, %c0_4] : memref<32x256xf32, #tpu.memory_space<vmem>>, vector<32x256xf32>
    tpu.vector_store %arg3[%c0_3, %c0_4], %2 {strides = array<i32>} : memref<32x256xf32, #tpu.memory_space<vmem>>, vector<32x256xf32>,
    return
  }
  func.func @transform_0(%arg0: i32) -> (i32, i32) {
    %c0_i32 = arith.constant 0 : i32
    %c0_i32_0 = arith.constant 0 : i32
    return %arg0, %c0_i32 : i32, i32
  }
  func.func @transform_1(%arg0: i32) -> (i32, i32) {
    %c0_i32 = arith.constant 0 : i32
    %c0_i32_0 = arith.constant 0 : i32
    %c0_i32_1 = arith.constant 0 : i32
    return %c0_i32, %c0_i32_0 : i32, i32
  }
  func.func @transform_2(%arg0: i32) -> (i32, i32) {
    %c0_i32 = arith.constant 0 : i32
    %c0_i32_0 = arith.constant 0 : i32
    return %arg0, %c0_i32 : i32, i32
  }
}

module attributes {stable_mosaic.version = 11 : i64} {
  func.func @_edge_message_kernel(%arg0: i32, %arg1: memref<160x192xf32, #tpu.memory_space<vmem>>, %arg2: memref<160x1xf32, #tpu.memory_space<vmem>>, %arg3: memref<160x1xf32, #tpu.memory_space<vmem>>, %arg4: memref<160x64xf32, #tpu.memory_space<vmem>>) attributes {dimension_semantics = [#tpu.dimension_semantics<parallel>], iteration_bounds = array<i64: 1>, scalar_prefetch = 0 : i64, scratch_operands = 0 : i64, tpu.core_type = #tpu.core_type<tc>, window_params = [{transform_indices = @transform_0, window_bounds = array<i64: 160, 192>}, {transform_indices = @transform_1, window_bounds = array<i64: 160, 1>}, {transform_indices = @transform_2, window_bounds = array<i64: 160, 1>}, {transform_indices = @transform_3, window_bounds = array<i64: 160, 64>}]} {
    %c0 = arith.constant 0 : index
    %c0_0 = arith.constant 0 : index
    %0 = vector.load %arg2[%c0, %c0_0] : memref<160x1xf32, #tpu.memory_space<vmem>>, vector<160x1xf32>
    %cst = arith.constant 2.000000e+00 : f32
    %1 = vector.broadcast %cst : f32 to vector<160x1xf32>
    %2 = arith.mulf %0, %1 : vector<160x1xf32>
    %c0_1 = arith.constant 0 : index
    %c0_2 = arith.constant 0 : index
    %3 = vector.load %arg1[%c0_1, %c0_2] : memref<160x192xf32, #tpu.memory_space<vmem>>, vector<160x192xf32>
    %cst_3 = arith.constant 0.000000e+00 : f32
    %4 = vector.broadcast %cst_3 : f32 to vector<160x64xf32>
    %cst_4 = arith.constant 0.000000e+00 : f32
    %5 = vector.broadcast %cst_4 : f32 to vector<160x1xf32>
    %6 = arith.subf %2, %5 : vector<160x1xf32>
    %7 = math.absf %6 : vector<160x1xf32>
    %cst_5 = arith.constant 1.000000e+00 : f32
    %8 = vector.broadcast %cst_5 : f32 to vector<160x1xf32>
    %9 = arith.subf %8, %7 : vector<160x1xf32>
    %cst_6 = arith.constant 0.000000e+00 : f32
    %10 = vector.broadcast %cst_6 : f32 to vector<160x1xf32>
    %11 = arith.maximumf %10, %9 : vector<160x1xf32>
    %12 = vector.extract_strided_slice %3 {offsets = [0, 0], sizes = [160, 64], strides = [1, 1]} : vector<160x192xf32> to vector<160x64xf32>
    %13 = vector.broadcast %11 : vector<160x1xf32> to vector<160x64xf32>
    %14 = arith.mulf %13, %12 : vector<160x64xf32>
    %15 = arith.addf %4, %14 : vector<160x64xf32>
    %cst_7 = arith.constant 1.000000e+00 : f32
    %16 = vector.broadcast %cst_7 : f32 to vector<160x1xf32>
    %17 = arith.subf %2, %16 : vector<160x1xf32>
    %18 = math.absf %17 : vector<160x1xf32>
    %cst_8 = arith.constant 1.000000e+00 : f32
    %19 = vector.broadcast %cst_8 : f32 to vector<160x1xf32>
    %20 = arith.subf %19, %18 : vector<160x1xf32>
    %cst_9 = arith.constant 0.000000e+00 : f32
    %21 = vector.broadcast %cst_9 : f32 to vector<160x1xf32>
    %22 = arith.maximumf %21, %20 : vector<160x1xf32>
    %23 = vector.extract_strided_slice %3 {offsets = [0, 64], sizes = [160, 64], strides = [1, 1]} : vector<160x192xf32> to vector<160x64xf32>
    %24 = vector.broadcast %22 : vector<160x1xf32> to vector<160x64xf32>
    %25 = arith.mulf %24, %23 : vector<160x64xf32>
    %26 = arith.addf %15, %25 : vector<160x64xf32>
    %cst_10 = arith.constant 2.000000e+00 : f32
    %27 = vector.broadcast %cst_10 : f32 to vector<160x1xf32>
    %28 = arith.subf %2, %27 : vector<160x1xf32>
    %29 = math.absf %28 : vector<160x1xf32>
    %cst_11 = arith.constant 1.000000e+00 : f32
    %30 = vector.broadcast %cst_11 : f32 to vector<160x1xf32>
    %31 = arith.subf %30, %29 : vector<160x1xf32>
    %cst_12 = arith.constant 0.000000e+00 : f32
    %32 = vector.broadcast %cst_12 : f32 to vector<160x1xf32>
    %33 = arith.maximumf %32, %31 : vector<160x1xf32>
    %34 = vector.extract_strided_slice %3 {offsets = [0, 128], sizes = [160, 64], strides = [1, 1]} : vector<160x192xf32> to vector<160x64xf32>
    %35 = vector.broadcast %33 : vector<160x1xf32> to vector<160x64xf32>
    %36 = arith.mulf %35, %34 : vector<160x64xf32>
    %37 = arith.addf %26, %36 : vector<160x64xf32>
    %c0_13 = arith.constant 0 : index
    %c0_14 = arith.constant 0 : index
    %38 = vector.load %arg3[%c0_13, %c0_14] : memref<160x1xf32, #tpu.memory_space<vmem>>, vector<160x1xf32>
    %39 = vector.broadcast %38 : vector<160x1xf32> to vector<160x64xf32>
    %40 = arith.mulf %37, %39 : vector<160x64xf32>
    %c0_15 = arith.constant 0 : index
    %c0_16 = arith.constant 0 : index
    %41 = vector.load %arg4[%c0_15, %c0_16] : memref<160x64xf32, #tpu.memory_space<vmem>>, vector<160x64xf32>
    tpu.vector_store %arg4[%c0_15, %c0_16], %40 {strides = array<i32>} : memref<160x64xf32, #tpu.memory_space<vmem>>, vector<160x64xf32>,
    return
  }
  func.func @transform_0(%arg0: i32) -> (i32, i32) {
    %c0_i32 = arith.constant 0 : i32
    %c0_i32_0 = arith.constant 0 : i32
    return %arg0, %c0_i32 : i32, i32
  }
  func.func @transform_1(%arg0: i32) -> (i32, i32) {
    %c0_i32 = arith.constant 0 : i32
    %c0_i32_0 = arith.constant 0 : i32
    return %arg0, %c0_i32 : i32, i32
  }
  func.func @transform_2(%arg0: i32) -> (i32, i32) {
    %c0_i32 = arith.constant 0 : i32
    %c0_i32_0 = arith.constant 0 : i32
    return %arg0, %c0_i32 : i32, i32
  }
  func.func @transform_3(%arg0: i32) -> (i32, i32) {
    %c0_i32 = arith.constant 0 : i32
    %c0_i32_0 = arith.constant 0 : i32
    return %arg0, %c0_i32 : i32, i32
  }
}

module attributes {stable_mosaic.version = 11 : i64} {
  func.func @_node_epilogue_kernel(%arg0: i32, %arg1: memref<32x64xf32, #tpu.memory_space<vmem>>, %arg2: memref<32x1xf32, #tpu.memory_space<vmem>>, %arg3: memref<32x64xf32, #tpu.memory_space<vmem>>, %arg4: memref<1x64xf32, #tpu.memory_space<vmem>>, %arg5: memref<1x64xf32, #tpu.memory_space<vmem>>, %arg6: memref<32x64xf32, #tpu.memory_space<vmem>>, %arg7: memref<32x1xf32, #tpu.memory_space<vmem>>) attributes {dimension_semantics = [#tpu.dimension_semantics<parallel>], iteration_bounds = array<i64: 1>, scalar_prefetch = 0 : i64, scratch_operands = 0 : i64, tpu.core_type = #tpu.core_type<tc>, window_params = [{transform_indices = @transform_0, window_bounds = array<i64: 32, 64>}, {transform_indices = @transform_1, window_bounds = array<i64: 32, 1>}, {transform_indices = @transform_2, window_bounds = array<i64: 32, 64>}, {pipeline_mode = #tpu.pipeline_mode<synchronous>, transform_indices = @transform_3, window_bounds = array<i64: 1, 64>}, {pipeline_mode = #tpu.pipeline_mode<synchronous>, transform_indices = @transform_4, window_bounds = array<i64: 1, 64>}, {transform_indices = @transform_5, window_bounds = array<i64: 32, 64>}, {transform_indices = @transform_6, window_bounds = array<i64: 32, 1>}]} {
    %c0 = arith.constant 0 : index
    %c0_0 = arith.constant 0 : index
    %0 = vector.load %arg2[%c0, %c0_0] : memref<32x1xf32, #tpu.memory_space<vmem>>, vector<32x1xf32>
    %cst = arith.constant 1.000000e+00 : f32
    %1 = vector.broadcast %cst : f32 to vector<32x1xf32>
    %2 = arith.maximumf %0, %1 : vector<32x1xf32>
    %3 = tpu.reciprocal %2 {approx = true} : vector<32x1xf32> -> vector<32x1xf32>
    %c0_1 = arith.constant 0 : index
    %c0_2 = arith.constant 0 : index
    %4 = vector.load %arg1[%c0_1, %c0_2] : memref<32x64xf32, #tpu.memory_space<vmem>>, vector<32x64xf32>
    %5 = vector.broadcast %3 : vector<32x1xf32> to vector<32x64xf32>
    %6 = arith.mulf %4, %5 : vector<32x64xf32>
    %c0_3 = arith.constant 0 : index
    %c0_4 = arith.constant 0 : index
    %7 = vector.load %arg3[%c0_3, %c0_4] : memref<32x64xf32, #tpu.memory_space<vmem>>, vector<32x64xf32>
    %8 = arith.addf %6, %7 : vector<32x64xf32>
    %c0_5 = arith.constant 0 : index
    %c0_6 = arith.constant 0 : index
    %9 = vector.load %arg4[%c0_5, %c0_6] : memref<1x64xf32, #tpu.memory_space<vmem>>, vector<1x64xf32>
    %10 = vector.broadcast %9 : vector<1x64xf32> to vector<32x64xf32>
    %11 = arith.addf %8, %10 : vector<32x64xf32>
    %cst_7 = arith.constant 5.000000e-01 : f32
    %12 = vector.broadcast %cst_7 : f32 to vector<32x64xf32>
    %13 = arith.mulf %12, %11 : vector<32x64xf32>
    %cst_8 = arith.constant 4.471500e-02 : f32
    %14 = vector.broadcast %cst_8 : f32 to vector<32x64xf32>
    %15 = arith.mulf %14, %11 : vector<32x64xf32>
    %16 = arith.mulf %15, %11 : vector<32x64xf32>
    %17 = arith.mulf %16, %11 : vector<32x64xf32>
    %18 = arith.addf %11, %17 : vector<32x64xf32>
    %cst_9 = arith.constant 0.797884583 : f32
    %19 = vector.broadcast %cst_9 : f32 to vector<32x64xf32>
    %20 = arith.mulf %19, %18 : vector<32x64xf32>
    %21 = math.tanh %20 : vector<32x64xf32>
    %cst_10 = arith.constant 1.000000e+00 : f32
    %22 = vector.broadcast %cst_10 : f32 to vector<32x64xf32>
    %23 = arith.addf %22, %21 : vector<32x64xf32>
    %24 = arith.mulf %13, %23 : vector<32x64xf32>
    %c0_11 = arith.constant 0 : index
    %c0_12 = arith.constant 0 : index
    %25 = vector.load %arg6[%c0_11, %c0_12] : memref<32x64xf32, #tpu.memory_space<vmem>>, vector<32x64xf32>
    tpu.vector_store %arg6[%c0_11, %c0_12], %24 {strides = array<i32>} : memref<32x64xf32, #tpu.memory_space<vmem>>, vector<32x64xf32>,
    %c0_13 = arith.constant 0 : index
    %c0_14 = arith.constant 0 : index
    %26 = vector.load %arg5[%c0_13, %c0_14] : memref<1x64xf32, #tpu.memory_space<vmem>>, vector<1x64xf32>
    %27 = arith.mulf %26, %26 : vector<1x64xf32>
    %cst_15 = arith.constant dense<0.000000e+00> : vector<1xf32>
    %28 = vector.multi_reduction <add>, %27, %cst_15 [1] : vector<1x64xf32> to vector<1xf32>
    %29 = vector.shape_cast %28 : vector<1xf32> to vector<1x1xf32>
    %30 = math.rsqrt %29 : vector<1x1xf32>
    %31 = vector.broadcast %26 : vector<1x64xf32> to vector<32x64xf32>
    %32 = arith.mulf %24, %31 : vector<32x64xf32>
    %cst_16 = arith.constant dense<0.000000e+00> : vector<32xf32>
    %33 = vector.multi_reduction <add>, %32, %cst_16 [1] : vector<32x64xf32> to vector<32xf32>
    %34 = vector.shape_cast %33 : vector<32xf32> to vector<32x1xf32>
    %35 = vector.broadcast %30 : vector<1x1xf32> to vector<32x1xf32>
    %36 = arith.mulf %34, %35 : vector<32x1xf32>
    %37 = math.tanh %36 : vector<32x1xf32>
    %c0_17 = arith.constant 0 : index
    %c0_18 = arith.constant 0 : index
    %38 = vector.load %arg7[%c0_17, %c0_18] : memref<32x1xf32, #tpu.memory_space<vmem>>, vector<32x1xf32>
    tpu.vector_store %arg7[%c0_17, %c0_18], %37 {strides = array<i32>} : memref<32x1xf32, #tpu.memory_space<vmem>>, vector<32x1xf32>,
    return
  }
  func.func @transform_0(%arg0: i32) -> (i32, i32) {
    %c0_i32 = arith.constant 0 : i32
    %c0_i32_0 = arith.constant 0 : i32
    return %arg0, %c0_i32 : i32, i32
  }
  func.func @transform_1(%arg0: i32) -> (i32, i32) {
    %c0_i32 = arith.constant 0 : i32
    %c0_i32_0 = arith.constant 0 : i32
    return %arg0, %c0_i32 : i32, i32
  }
  func.func @transform_2(%arg0: i32) -> (i32, i32) {
    %c0_i32 = arith.constant 0 : i32
    %c0_i32_0 = arith.constant 0 : i32
    return %arg0, %c0_i32 : i32, i32
  }
  func.func @transform_3(%arg0: i32) -> (i32, i32) {
    %c0_i32 = arith.constant 0 : i32
    %c0_i32_0 = arith.constant 0 : i32
    %c0_i32_1 = arith.constant 0 : i32
    return %c0_i32, %c0_i32_0 : i32, i32
  }
  func.func @transform_4(%arg0: i32) -> (i32, i32) {
    %c0_i32 = arith.constant 0 : i32
    %c0_i32_0 = arith.constant 0 : i32
    %c0_i32_1 = arith.constant 0 : i32
    return %c0_i32, %c0_i32_0 : i32, i32
  }
  func.func @transform_5(%arg0: i32) -> (i32, i32) {
    %c0_i32 = arith.constant 0 : i32
    %c0_i32_0 = arith.constant 0 : i32
    return %arg0, %c0_i32 : i32, i32
  }
  func.func @transform_6(%arg0: i32) -> (i32, i32) {
    %c0_i32 = arith.constant 0 : i32
    %c0_i32_0 = arith.constant 0 : i32
    return %arg0, %c0_i32 : i32, i32
  }
}

module attributes {stable_mosaic.version = 11 : i64} {
  func.func @_transform_kernel(%arg0: i32, %arg1: memref<32x64xf32, #tpu.memory_space<vmem>>, %arg2: memref<64x256xf32, #tpu.memory_space<vmem>>, %arg3: memref<32x256xf32, #tpu.memory_space<vmem>>) attributes {dimension_semantics = [#tpu.dimension_semantics<parallel>], iteration_bounds = array<i64: 1>, scalar_prefetch = 0 : i64, scratch_operands = 0 : i64, tpu.core_type = #tpu.core_type<tc>, window_params = [{transform_indices = @transform_0, window_bounds = array<i64: 32, 64>}, {pipeline_mode = #tpu.pipeline_mode<synchronous>, transform_indices = @transform_1, window_bounds = array<i64: 64, 256>}, {transform_indices = @transform_2, window_bounds = array<i64: 32, 256>}]} {
    %c0 = arith.constant 0 : index
    %c0_0 = arith.constant 0 : index
    %0 = vector.load %arg1[%c0, %c0_0] : memref<32x64xf32, #tpu.memory_space<vmem>>, vector<32x64xf32>
    %c0_1 = arith.constant 0 : index
    %c0_2 = arith.constant 0 : index
    %1 = vector.load %arg2[%c0_1, %c0_2] : memref<64x256xf32, #tpu.memory_space<vmem>>, vector<64x256xf32>
    %2 = arith.truncf %0 : vector<32x64xf32> to vector<32x64xbf16>
    %3 = arith.truncf %1 : vector<64x256xf32> to vector<64x256xbf16>
    %cst = arith.constant dense<0.000000e+00> : vector<32x256xf32>
    %4 = tpu.matmul %2, %3, %cst {dimension_numbers = #tpu.dot_dimension_numbers<[1], [0], [0], [1], [0, 0, 1, 1], [], []>} : vector<32x64xbf16>, vector<64x256xbf16>, vector<32x256xf32> -> vector<32x256xf32>
    %c0_3 = arith.constant 0 : index
    %c0_4 = arith.constant 0 : index
    %5 = vector.load %arg3[%c0_3, %c0_4] : memref<32x256xf32, #tpu.memory_space<vmem>>, vector<32x256xf32>
    tpu.vector_store %arg3[%c0_3, %c0_4], %4 {strides = array<i32>} : memref<32x256xf32, #tpu.memory_space<vmem>>, vector<32x256xf32>,
    return
  }
  func.func @transform_0(%arg0: i32) -> (i32, i32) {
    %c0_i32 = arith.constant 0 : i32
    %c0_i32_0 = arith.constant 0 : i32
    return %arg0, %c0_i32 : i32, i32
  }
  func.func @transform_1(%arg0: i32) -> (i32, i32) {
    %c0_i32 = arith.constant 0 : i32
    %c0_i32_0 = arith.constant 0 : i32
    %c0_i32_1 = arith.constant 0 : i32
    return %c0_i32, %c0_i32_0 : i32, i32
  }
  func.func @transform_2(%arg0: i32) -> (i32, i32) {
    %c0_i32 = arith.constant 0 : i32
    %c0_i32_0 = arith.constant 0 : i32
    return %arg0, %c0_i32 : i32, i32
  }
}

module attributes {stable_mosaic.version = 11 : i64} {
  func.func @_readout_kernel(%arg0: memref<32x64xf32, #tpu.memory_space<vmem>>, %arg1: memref<32x2xf32, #tpu.memory_space<vmem>>, %arg2: memref<2x128xf32, #tpu.memory_space<vmem>>) attributes {dimension_semantics = [], scalar_prefetch = 0 : i64, scratch_operands = 0 : i64, tpu.core_type = #tpu.core_type<tc>} {
    %c0 = arith.constant 0 : index
    %c0_0 = arith.constant 0 : index
    %0 = vector.load %arg0[%c0, %c0_0] : memref<32x64xf32, #tpu.memory_space<vmem>>, vector<32x64xf32>
    %c0_1 = arith.constant 0 : index
    %c0_2 = arith.constant 0 : index
    %1 = vector.load %arg1[%c0_1, %c0_2] : memref<32x2xf32, #tpu.memory_space<vmem>>, vector<32x2xf32>
    %2 = vector.extract_strided_slice %1 {offsets = [0, 0], sizes = [32, 1], strides = [1, 1]} : vector<32x2xf32> to vector<32x1xf32>
    %cst = arith.constant dense<0.000000e+00> : vector<1xf32>
    %3 = vector.multi_reduction <add>, %2, %cst [0] : vector<32x1xf32> to vector<1xf32>
    %4 = vector.shape_cast %3 : vector<1xf32> to vector<1x1xf32>
    %5 = vector.broadcast %2 : vector<32x1xf32> to vector<32x64xf32>
    %6 = arith.mulf %5, %0 : vector<32x64xf32>
    %cst_3 = arith.constant dense<0.000000e+00> : vector<64xf32>
    %7 = vector.multi_reduction <add>, %6, %cst_3 [0] : vector<32x64xf32> to vector<64xf32>
    %8 = vector.shape_cast %7 : vector<64xf32> to vector<1x64xf32>
    %cst_4 = arith.constant 1.000000e+00 : f32
    %9 = vector.broadcast %cst_4 : f32 to vector<1x1xf32>
    %10 = arith.maximumf %4, %9 : vector<1x1xf32>
    %11 = tpu.reciprocal %10 {approx = true} : vector<1x1xf32> -> vector<1x1xf32>
    %12 = vector.broadcast %11 : vector<1x1xf32> to vector<1x64xf32>
    %13 = arith.mulf %8, %12 : vector<1x64xf32>
    %cst_5 = arith.constant 5.000000e-01 : f32
    %14 = vector.broadcast %cst_5 : f32 to vector<32x1xf32>
    %15 = arith.cmpf ogt, %2, %14 : vector<32x1xf32>
    %cst_6 = arith.constant -3.000000e+38 : f32
    %16 = vector.shape_cast %15 : vector<32x1xi1> to vector<32x1xi1>
    %17 = vector.broadcast %16 : vector<32x1xi1> to vector<32x64xi1>
    %18 = vector.broadcast %cst_6 : f32 to vector<32x64xf32>
    %19 = arith.select %17, %0, %18 : vector<32x64xi1>, vector<32x64xf32>
    %cst_7 = arith.constant dense<0xFF800000> : vector<64xf32>
    %20 = vector.multi_reduction <maximumf>, %19, %cst_7 [0] : vector<32x64xf32> to vector<64xf32>
    %21 = vector.shape_cast %20 : vector<64xf32> to vector<1x64xf32>
    %cst_8 = arith.constant 0.000000e+00 : f32
    %22 = vector.broadcast %cst_8 : f32 to vector<1x1xf32>
    %23 = arith.cmpf ogt, %4, %22 : vector<1x1xf32>
    %cst_9 = arith.constant 0.000000e+00 : f32
    %24 = vector.shape_cast %23 : vector<1x1xi1> to vector<1x1xi1>
    %25 = vector.broadcast %24 : vector<1x1xi1> to vector<1x64xi1>
    %26 = vector.broadcast %cst_9 : f32 to vector<1x64xf32>
    %27 = arith.select %25, %21, %26 : vector<1x64xi1>, vector<1x64xf32>
    %28 = tpu.concatenate %27, %13 in 1 : vector<1x64xf32>, vector<1x64xf32> -> vector<1x128xf32>
    %29 = vector.extract_strided_slice %1 {offsets = [0, 1], sizes = [32, 1], strides = [1, 1]} : vector<32x2xf32> to vector<32x1xf32>
    %cst_10 = arith.constant dense<0.000000e+00> : vector<1xf32>
    %30 = vector.multi_reduction <add>, %29, %cst_10 [0] : vector<32x1xf32> to vector<1xf32>
    %31 = vector.shape_cast %30 : vector<1xf32> to vector<1x1xf32>
    %32 = vector.broadcast %29 : vector<32x1xf32> to vector<32x64xf32>
    %33 = arith.mulf %32, %0 : vector<32x64xf32>
    %cst_11 = arith.constant dense<0.000000e+00> : vector<64xf32>
    %34 = vector.multi_reduction <add>, %33, %cst_11 [0] : vector<32x64xf32> to vector<64xf32>
    %35 = vector.shape_cast %34 : vector<64xf32> to vector<1x64xf32>
    %cst_12 = arith.constant 1.000000e+00 : f32
    %36 = vector.broadcast %cst_12 : f32 to vector<1x1xf32>
    %37 = arith.maximumf %31, %36 : vector<1x1xf32>
    %38 = tpu.reciprocal %37 {approx = true} : vector<1x1xf32> -> vector<1x1xf32>
    %39 = vector.broadcast %38 : vector<1x1xf32> to vector<1x64xf32>
    %40 = arith.mulf %35, %39 : vector<1x64xf32>
    %cst_13 = arith.constant 5.000000e-01 : f32
    %41 = vector.broadcast %cst_13 : f32 to vector<32x1xf32>
    %42 = arith.cmpf ogt, %29, %41 : vector<32x1xf32>
    %cst_14 = arith.constant -3.000000e+38 : f32
    %43 = vector.shape_cast %42 : vector<32x1xi1> to vector<32x1xi1>
    %44 = vector.broadcast %43 : vector<32x1xi1> to vector<32x64xi1>
    %45 = vector.broadcast %cst_14 : f32 to vector<32x64xf32>
    %46 = arith.select %44, %0, %45 : vector<32x64xi1>, vector<32x64xf32>
    %cst_15 = arith.constant dense<0xFF800000> : vector<64xf32>
    %47 = vector.multi_reduction <maximumf>, %46, %cst_15 [0] : vector<32x64xf32> to vector<64xf32>
    %48 = vector.shape_cast %47 : vector<64xf32> to vector<1x64xf32>
    %cst_16 = arith.constant 0.000000e+00 : f32
    %49 = vector.broadcast %cst_16 : f32 to vector<1x1xf32>
    %50 = arith.cmpf ogt, %31, %49 : vector<1x1xf32>
    %cst_17 = arith.constant 0.000000e+00 : f32
    %51 = vector.shape_cast %50 : vector<1x1xi1> to vector<1x1xi1>
    %52 = vector.broadcast %51 : vector<1x1xi1> to vector<1x64xi1>
    %53 = vector.broadcast %cst_17 : f32 to vector<1x64xf32>
    %54 = arith.select %52, %48, %53 : vector<1x64xi1>, vector<1x64xf32>
    %55 = tpu.concatenate %54, %40 in 1 : vector<1x64xf32>, vector<1x64xf32> -> vector<1x128xf32>
    %56 = tpu.concatenate %28, %55 in 0 : vector<1x128xf32>, vector<1x128xf32> -> vector<2x128xf32>
    %c0_18 = arith.constant 0 : index
    %c0_19 = arith.constant 0 : index
    %57 = vector.load %arg2[%c0_18, %c0_19] : memref<2x128xf32, #tpu.memory_space<vmem>>, vector<2x128xf32>
    tpu.vector_store %arg2[%c0_18, %c0_19], %56 {strides = array<i32>} : memref<2x128xf32, #tpu.memory_space<vmem>>, vector<2x128xf32>,
    return
  }
}

module attributes {stable_mosaic.version = 11 : i64} {
  func.func @_head_kernel(%arg0: memref<2x128xf32, #tpu.memory_space<vmem>>, %arg1: memref<2x128xf32, #tpu.memory_space<vmem>>, %arg2: memref<2x128xf32, #tpu.memory_space<vmem>>, %arg3: memref<2x128xf32, #tpu.memory_space<vmem>>, %arg4: memref<128x64xf32, #tpu.memory_space<vmem>>, %arg5: memref<1x64xf32, #tpu.memory_space<vmem>>, %arg6: memref<64x64xf32, #tpu.memory_space<vmem>>, %arg7: memref<1x64xf32, #tpu.memory_space<vmem>>, %arg8: memref<64x3xf32, #tpu.memory_space<vmem>>, %arg9: memref<1x3xf32, #tpu.memory_space<vmem>>, %arg10: memref<2x3xf32, #tpu.memory_space<vmem>>) attributes {dimension_semantics = [], scalar_prefetch = 0 : i64, scratch_operands = 0 : i64, tpu.core_type = #tpu.core_type<tc>} {
    %c0 = arith.constant 0 : index
    %c0_0 = arith.constant 0 : index
    %0 = vector.load %arg0[%c0, %c0_0] : memref<2x128xf32, #tpu.memory_space<vmem>>, vector<2x128xf32>
    %c0_1 = arith.constant 0 : index
    %c0_2 = arith.constant 0 : index
    %1 = vector.load %arg1[%c0_1, %c0_2] : memref<2x128xf32, #tpu.memory_space<vmem>>, vector<2x128xf32>
    %2 = arith.addf %0, %1 : vector<2x128xf32>
    %c0_3 = arith.constant 0 : index
    %c0_4 = arith.constant 0 : index
    %3 = vector.load %arg2[%c0_3, %c0_4] : memref<2x128xf32, #tpu.memory_space<vmem>>, vector<2x128xf32>
    %4 = arith.addf %2, %3 : vector<2x128xf32>
    %c0_5 = arith.constant 0 : index
    %c0_6 = arith.constant 0 : index
    %5 = vector.load %arg3[%c0_5, %c0_6] : memref<2x128xf32, #tpu.memory_space<vmem>>, vector<2x128xf32>
    %6 = arith.addf %4, %5 : vector<2x128xf32>
    %c0_7 = arith.constant 0 : index
    %c0_8 = arith.constant 0 : index
    %7 = vector.load %arg4[%c0_7, %c0_8] : memref<128x64xf32, #tpu.memory_space<vmem>>, vector<128x64xf32>
    %cst = arith.constant dense<0.000000e+00> : vector<2x64xf32>
    %8 = tpu.matmul %6, %7, %cst {dimension_numbers = #tpu.dot_dimension_numbers<[1], [0], [0], [1], [0, 0, 1, 1], [], []>} : vector<2x128xf32>, vector<128x64xf32>, vector<2x64xf32> -> vector<2x64xf32>
    %c0_9 = arith.constant 0 : index
    %c0_10 = arith.constant 0 : index
    %9 = vector.load %arg5[%c0_9, %c0_10] : memref<1x64xf32, #tpu.memory_space<vmem>>, vector<1x64xf32>
    %10 = vector.broadcast %9 : vector<1x64xf32> to vector<2x64xf32>
    %11 = arith.addf %8, %10 : vector<2x64xf32>
    %cst_11 = arith.constant 5.000000e-01 : f32
    %12 = vector.broadcast %cst_11 : f32 to vector<2x64xf32>
    %13 = arith.mulf %12, %11 : vector<2x64xf32>
    %cst_12 = arith.constant 4.471500e-02 : f32
    %14 = vector.broadcast %cst_12 : f32 to vector<2x64xf32>
    %15 = arith.mulf %14, %11 : vector<2x64xf32>
    %16 = arith.mulf %15, %11 : vector<2x64xf32>
    %17 = arith.mulf %16, %11 : vector<2x64xf32>
    %18 = arith.addf %11, %17 : vector<2x64xf32>
    %cst_13 = arith.constant 0.797884583 : f32
    %19 = vector.broadcast %cst_13 : f32 to vector<2x64xf32>
    %20 = arith.mulf %19, %18 : vector<2x64xf32>
    %21 = math.tanh %20 : vector<2x64xf32>
    %cst_14 = arith.constant 1.000000e+00 : f32
    %22 = vector.broadcast %cst_14 : f32 to vector<2x64xf32>
    %23 = arith.addf %22, %21 : vector<2x64xf32>
    %24 = arith.mulf %13, %23 : vector<2x64xf32>
    %c0_15 = arith.constant 0 : index
    %c0_16 = arith.constant 0 : index
    %25 = vector.load %arg6[%c0_15, %c0_16] : memref<64x64xf32, #tpu.memory_space<vmem>>, vector<64x64xf32>
    %cst_17 = arith.constant dense<0.000000e+00> : vector<2x64xf32>
    %26 = tpu.matmul %24, %25, %cst_17 {dimension_numbers = #tpu.dot_dimension_numbers<[1], [0], [0], [1], [0, 0, 1, 1], [], []>} : vector<2x64xf32>, vector<64x64xf32>, vector<2x64xf32> -> vector<2x64xf32>
    %c0_18 = arith.constant 0 : index
    %c0_19 = arith.constant 0 : index
    %27 = vector.load %arg7[%c0_18, %c0_19] : memref<1x64xf32, #tpu.memory_space<vmem>>, vector<1x64xf32>
    %28 = vector.broadcast %27 : vector<1x64xf32> to vector<2x64xf32>
    %29 = arith.addf %26, %28 : vector<2x64xf32>
    %cst_20 = arith.constant 5.000000e-01 : f32
    %30 = vector.broadcast %cst_20 : f32 to vector<2x64xf32>
    %31 = arith.mulf %30, %29 : vector<2x64xf32>
    %cst_21 = arith.constant 4.471500e-02 : f32
    %32 = vector.broadcast %cst_21 : f32 to vector<2x64xf32>
    %33 = arith.mulf %32, %29 : vector<2x64xf32>
    %34 = arith.mulf %33, %29 : vector<2x64xf32>
    %35 = arith.mulf %34, %29 : vector<2x64xf32>
    %36 = arith.addf %29, %35 : vector<2x64xf32>
    %cst_22 = arith.constant 0.797884583 : f32
    %37 = vector.broadcast %cst_22 : f32 to vector<2x64xf32>
    %38 = arith.mulf %37, %36 : vector<2x64xf32>
    %39 = math.tanh %38 : vector<2x64xf32>
    %cst_23 = arith.constant 1.000000e+00 : f32
    %40 = vector.broadcast %cst_23 : f32 to vector<2x64xf32>
    %41 = arith.addf %40, %39 : vector<2x64xf32>
    %42 = arith.mulf %31, %41 : vector<2x64xf32>
    %c0_24 = arith.constant 0 : index
    %c0_25 = arith.constant 0 : index
    %43 = vector.load %arg8[%c0_24, %c0_25] : memref<64x3xf32, #tpu.memory_space<vmem>>, vector<64x3xf32>
    %cst_26 = arith.constant dense<0.000000e+00> : vector<2x3xf32>
    %44 = tpu.matmul %42, %43, %cst_26 {dimension_numbers = #tpu.dot_dimension_numbers<[1], [0], [0], [1], [0, 0, 1, 1], [], []>} : vector<2x64xf32>, vector<64x3xf32>, vector<2x3xf32> -> vector<2x3xf32>
    %c0_27 = arith.constant 0 : index
    %c0_28 = arith.constant 0 : index
    %45 = vector.load %arg9[%c0_27, %c0_28] : memref<1x3xf32, #tpu.memory_space<vmem>>, vector<1x3xf32>
    %46 = vector.broadcast %45 : vector<1x3xf32> to vector<2x3xf32>
    %47 = arith.addf %44, %46 : vector<2x3xf32>
    %c0_29 = arith.constant 0 : index
    %c0_30 = arith.constant 0 : index
    %48 = vector.load %arg10[%c0_29, %c0_30] : memref<2x3xf32, #tpu.memory_space<vmem>>, vector<2x3xf32>
    tpu.vector_store %arg10[%c0_29, %c0_30], %47 {strides = array<i32>} : memref<2x3xf32, #tpu.memory_space<vmem>>, vector<2x3xf32>,
    return
  }
}

</mosaic_0001>

<llo_original>
// kernel: recognizer_spl_forward.17
$region0: #{recognizer_spl_forward.17}
  #allocation0 [shape = 'u32[]', space=smem, size = 0x4, offset = 0x4, fixed_abs, tag = 'smem constant byte address 0x4 - core index']
  #allocation1 [shape = 'u32[144,128]{1,0:T(1,128)}', space=vmem, size = 0x12000, scoped, tag = 'internal scratch']
  %s0 = inlined_call_operand.vmem [shape: f32[32,4], index: 0, kind: input, shape index: {}]
  %s1 = inlined_call_operand.vmem [shape: f32[4,256], index: 1, kind: input, shape index: {}]
  %s2 = inlined_call_operand.vmem [shape: f32[32,256], index: 2, kind: output, shape index: {}]
  %s3 = sld [smem:[#allocation0]]
  $region18: #{recognizer_spl_forward.17} parent=0
    _
  %s5 = ssub.s32 1, %s3
  %s6 = scalar_select 0, %s5, %s3
  // Predicated region
  $region2: #{recognizer_spl_forward.17} parent=0 // pred_check
    _
  $region3: #{recognizer_spl_forward.17} parent=0 // pred_check_branch
    %8 = sbr.rel (0) target = $region5
  $region4: #{recognizer_spl_forward.17} parent=0 // pred_region
    _
  $region5: #{recognizer_spl_forward.17} parent=0 // pred_fallthru
    _
  // Predicated region
  $region6: #{recognizer_spl_forward.17} parent=0 // pred_check
    _
  $region7: #{recognizer_spl_forward.17} parent=0 // pred_check_branch
    %10 = sbr.rel (0) target = $region9
  $region8: #{recognizer_spl_forward.17} parent=0 // pred_region
    _
  $region9: #{recognizer_spl_forward.17} parent=0 // pred_fallthru
    _
  %v11 = vld [vmem:[%s0] sm:$0xff]
  %v12 = vld [vmem:[%s0 + $0x8] sm:$0xff]
  %v13 = vld [vmem:[%s0 + $0x10] sm:$0xff]
  %v14 = vld [vmem:[%s0 + $0x18] sm:$0xff]
  %v15 = vld [vmem:[%s1] sm:$0xff]
  %v17 = vcombine.high %v15, %v15
  %vm18 = vcmask 31744
  %v20 = vsel %vm18, %v11, 0
  %v23 = vsel %vm18, %v12, 0
  %v26 = vsel %vm18, %v13, 0
  %v29 = vsel %vm18, %v14, 0
  %vm31 = vcmask 1043456
  %v32 = vsel %vm31, %v15, 0
  %v34 = vsel %vm31, %v17, 0
  %36 = vmatprep.subr.mxu0 %v34
  %37 = vmatpush1.msra.mxu0 %v32
  %38 = vmatprep.subr.mxu0 0.0
  %39 = vmatpush1.msra.mxu0 0.0
  %40 = vmatprep.subr.mxu0 0.0
  %41 = vmatpush1.msra.mxu0 0.0
  %42 = vmatprep.subr.mxu0 0.0
  %43 = vmatpush1.msra.mxu0 0.0
  %44 = vmatprep.subr.mxu0 0.0
  %45 = vmatpush1.msra.mxu0 0.0
  %46 = vmatprep.subr.mxu0 0.0
  %47 = vmatpush1.msra.mxu0 0.0
  %48 = vmatprep.subr.mxu0 0.0
  %49 = vmatpush1.msra.mxu0 0.0
  %50 = vmatprep.subr.mxu0 0.0
  %51 = vmatpush1.msra.mxu0 0.0
  %52 = vmatprep.subr.mxu0 0.0
  %53 = vmatpush1.msra.mxu0 0.0
  %54 = vmatprep.subr.mxu0 0.0
  %55 = vmatpush1.msra.mxu0 0.0
  %56 = vmatprep.subr.mxu0 0.0
  %57 = vmatpush1.msra.mxu0 0.0
  %58 = vmatprep.subr.mxu0 0.0
  %59 = vmatpush1.msra.mxu0 0.0
  %60 = vmatprep.subr.mxu0 0.0
  %61 = vmatpush1.msra.mxu0 0.0
  %62 = vmatprep.subr.mxu0 0.0
  %63 = vmatpush1.msra.mxu0 0.0
  %64 = vmatprep.subr.mxu0 0.0
  %65 = vmatpush1.msra.mxu0 0.0
  %66 = vmatprep.subr.mxu0 0.0
  %67 = vmatpush1.msra.mxu0 0.0
  %68 = vmatprep.subr.mxu0 0.0
  %69 = vmatpush1.msra.mxu0 0.0
  %70 = vmatprep.subr.mxu0 0.0
  %71 = vmatpush1.msra.mxu0 0.0
  %72 = vmatprep.subr.mxu0 0.0
  %73 = vmatpush1.msra.mxu0 0.0
  %74 = vmatprep.subr.mxu0 0.0
  %75 = vmatpush1.msra.mxu0 0.0
  %76 = vmatprep.subr.mxu0 0.0
  %77 = vmatpush1.msra.mxu0 0.0
  %78 = vmatprep.subr.mxu0 0.0
  %79 = vmatpush1.msra.mxu0 0.0
  %80 = vmatprep.subr.mxu0 0.0
  %81 = vmatpush1.msra.mxu0 0.0
  %82 = vmatprep.subr.mxu0 0.0
  %83 = vmatpush1.msra.mxu0 0.0
  %84 = vmatprep.subr.mxu0 0.0
  %85 = vmatpush1.msra.mxu0 0.0
  %86 = vmatprep.subr.mxu0 0.0
  %87 = vmatpush1.msra.mxu0 0.0
  %88 = vmatprep.subr.mxu0 0.0
  %89 = vmatpush1.msra.mxu0 0.0
  %90 = vmatprep.subr.mxu0 0.0
  %91 = vmatpush1.msra.mxu0 0.0
  %92 = vmatprep.subr.mxu0 0.0
  %93 = vmatpush1.msra.mxu0 0.0
  %94 = vmatprep.subr.mxu0 0.0
  %95 = vmatpush1.msra.mxu0 0.0
  %96 = vmatprep.subr.mxu0 0.0
  %97 = vmatpush1.msra.mxu0 0.0
  %98 = vmatprep.subr.mxu0 0.0
  %99 = vmatpush1.msra.mxu0 0.0
  %100 = vmatprep.mubr.f32.mxu0 0.0
  %101 = vmatmul.mubr.f32.gmra.mrb[0].mxu0 %v20
  %v102 = vpop.f32.mrb[0].mxu0
  %v103 = vadd.f32 0.0, %v102
  %v104 = vpop.f32.mrb[0].mxu0
  %v105 = vadd.f32 0.0, %v104
  %106 = vmatprep.mubr.f32.mxu0 0.0
  %107 = vmatmul.mubr.f32.gmra.mrb[0].mxu0 %v23
  %v108 = vpop.f32.mrb[0].mxu0
  %v109 = vadd.f32 0.0, %v108
  %v110 = vpop.f32.mrb[0].mxu0
  %v111 = vadd.f32 0.0, %v110
  %112 = vmatprep.mubr.f32.mxu0 0.0
  %113 = vmatmul.mubr.f32.gmra.mrb[0].mxu0 %v26
  %v114 = vpop.f32.mrb[0].mxu0
  %v115 = vadd.f32 0.0, %v114
  %v116 = vpop.f32.mrb[0].mxu0
  %v117 = vadd.f32 0.0, %v116
  %118 = vmatprep.mubr.f32.mxu0 0.0
  %119 = vmatmul.mubr.f32.gmra.mrb[0].mxu0 %v29
  %v120 = vpop.f32.mrb[0].mxu0
  %v121 = vadd.f32 0.0, %v120
  %v122 = vpop.f32.mrb[0].mxu0
  %v123 = vadd.f32 0.0, %v122
  %124 = vdwg.mxu0
  %125 = vst [vmem:[%s2] sm:$0xff] %v103
  %126 = vst [vmem:[%s2 + $0x8] sm:$0xff] %v105
  %127 = vst [vmem:[%s2 + $0x10] sm:$0xff] %v109
  %128 = vst [vmem:[%s2 + $0x18] sm:$0xff] %v111
  %129 = vst [vmem:[%s2 + $0x20] sm:$0xff] %v115
  %130 = vst [vmem:[%s2 + $0x28] sm:$0xff] %v117
  %131 = vst [vmem:[%s2 + $0x30] sm:$0xff] %v121
  %132 = vst [vmem:[%s2 + $0x38] sm:$0xff] %v123
  // Predicated region
  $region10: #{recognizer_spl_forward.17} parent=0 // pred_check
    _
  $region11: #{recognizer_spl_forward.17} parent=0 // pred_check_branch
    %134 = sbr.rel (0) target = $region13
  $region12: #{recognizer_spl_forward.17} parent=0 // pred_region
    _
  $region13: #{recognizer_spl_forward.17} parent=0 // pred_fallthru
    _
  // Predicated region
  $region14: #{recognizer_spl_forward.17} parent=0 // pred_check
    _
  $region15: #{recognizer_spl_forward.17} parent=0 // pred_check_branch
    %136 = sbr.rel (0) target = $region17
  $region16: #{recognizer_spl_forward.17} parent=0 // pred_region
    _
  $region17: #{recognizer_spl_forward.17} parent=0 // pred_fallthru
    _

// kernel: recognizer_spl_forward.19
$region0: #{recognizer_spl_forward.19}
  #allocation0 [shape = 'u32[]', space=smem, size = 0x4, offset = 0x4, fixed_abs, tag = 'smem constant byte address 0x4 - core index']
  #allocation1 [shape = 'u32[144,128]{1,0:T(1,128)}', space=vmem, size = 0x12000, scoped, tag = 'internal scratch']
  %s0 = inlined_call_operand.vmem [shape: f32[32,64], index: 0, kind: input, shape index: {}]
  %s1 = inlined_call_operand.vmem [shape: f32[32,1], index: 1, kind: input, shape index: {}]
  %s2 = inlined_call_operand.vmem [shape: f32[32,64], index: 2, kind: input, shape index: {}]
  %s3 = inlined_call_operand.vmem [shape: f32[1,64], index: 3, kind: input, shape index: {}]
  %s4 = inlined_call_operand.vmem [shape: f32[1,64], index: 4, kind: input, shape index: {}]
  %s5 = inlined_call_operand.vmem [shape: f32[32,64], index: 5, kind: output, shape index: {0}]
  %s6 = inlined_call_operand.vmem [shape: f32[32,1], index: 6, kind: output, shape index: {1}]
  %7 = xla_tuple %s5, %s6
  %s8 = sld [smem:[#allocation0]]
  $region38: #{recognizer_spl_forward.19} parent=0
    _
  %s10 = ssub.s32 1, %s8
  %s11 = scalar_select 0, %s10, %s8
  // Predicated region
  $region2: #{recognizer_spl_forward.19} parent=0 // pred_check
    _
  $region3: #{recognizer_spl_forward.19} parent=0 // pred_check_branch
    %13 = sbr.rel (0) target = $region5
  $region4: #{recognizer_spl_forward.19} parent=0 // pred_region
    _
  $region5: #{recognizer_spl_forward.19} parent=0 // pred_fallthru
    _
  // Predicated region
  $region6: #{recognizer_spl_forward.19} parent=0 // pred_check
    _
  $region7: #{recognizer_spl_forward.19} parent=0 // pred_check_branch
    %15 = sbr.rel (0) target = $region9
  $region8: #{recognizer_spl_forward.19} parent=0 // pred_region
    _
  $region9: #{recognizer_spl_forward.19} parent=0 // pred_fallthru
    _
  // Predicated region
  $region10: #{recognizer_spl_forward.19} parent=0 // pred_check
    _
  $region11: #{recognizer_spl_forward.19} parent=0 // pred_check_branch
    %17 = sbr.rel (0) target = $region13
  $region12: #{recognizer_spl_forward.19} parent=0 // pred_region
    _
  $region13: #{recognizer_spl_forward.19} parent=0 // pred_fallthru
    _
  // Predicated region
  $region14: #{recognizer_spl_forward.19} parent=0 // pred_check
    _
  $region15: #{recognizer_spl_forward.19} parent=0 // pred_check_branch
    %19 = sbr.rel (0) target = $region17
  $region16: #{recognizer_spl_forward.19} parent=0 // pred_region
    _
  $region17: #{recognizer_spl_forward.19} parent=0 // pred_fallthru
    _
  // Predicated region
  $region18: #{recognizer_spl_forward.19} parent=0 // pred_check
    _
  $region19: #{recognizer_spl_forward.19} parent=0 // pred_check_branch
    %21 = sbr.rel (0) target = $region21
  $region20: #{recognizer_spl_forward.19} parent=0 // pred_region
    _
  $region21: #{recognizer_spl_forward.19} parent=0 // pred_fallthru
    _
  %v22 = vld [vmem:[%s1] sm:$0xff]
  %v23 = vld [vmem:[%s1 + $0x8] sm:$0xff]
  %v24 = vld [vmem:[%s1 + $0x10] sm:$0xff]
  %v25 = vld [vmem:[%s1 + $0x18] sm:$0xff]
  %v26 = vmax.f32 %v22, 1.0
  %v27 = vmax.f32 %v23, 1.0
  %v28 = vmax.f32 %v24, 1.0
  %v29 = vmax.f32 %v25, 1.0
  %v30 = vrcp.pop %v26
  %v31 = vrcp.pop %v27
  %v32 = vrcp.pop %v28
  %v33 = vrcp.pop %v29
  %v34 = vld [vmem:[%s0] sm:$0xff]
  %v35 = vld [vmem:[%s0 + $0x8] sm:$0xff]
  %v36 = vld [vmem:[%s0 + $0x10] sm:$0xff]
  %v37 = vld [vmem:[%s0 + $0x18] sm:$0xff]
  %39 = vset.pattern.permute.xlu0 0
  %40 = vperm.xlu0 %39, %v30
  %v41 = vpop.permute.xlu0 %40
  %44 = vset.pattern.permute.xlu0 0
  %45 = vperm.xlu0 %44, %v31
  %v46 = vpop.permute.xlu0 %45
  %49 = vset.pattern.permute.xlu0 0
  %50 = vperm.xlu0 %49, %v32
  %v51 = vpop.permute.xlu0 %50
  %54 = vset.pattern.permute.xlu0 0
  %55 = vperm.xlu0 %54, %v33
  %v56 = vpop.permute.xlu0 %55
  %v58 = vmul.f32 %v34, %v41
  %v59 = vmul.f32 %v35, %v46
  %v60 = vmul.f32 %v36, %v51
  %v61 = vmul.f32 %v37, %v56
  %v62 = vld [vmem:[%s2] sm:$0xff]
  %v63 = vld [vmem:[%s2 + $0x8] sm:$0xff]
  %v64 = vld [vmem:[%s2 + $0x10] sm:$0xff]
  %v65 = vld [vmem:[%s2 + $0x18] sm:$0xff]
  %v66 = vadd.f32 %v58, %v62
  %v67 = vadd.f32 %v59, %v63
  %v68 = vadd.f32 %v60, %v64
  %v69 = vadd.f32 %v61, %v65
  %v70 = vld [vmem:[%s3] sm:$0x1]
  %v72 = vlaneseq
  %v73 = vshrl.u32 %v72, 7
  %v74 = vsub.s32 0, %v73
  %v75 = vrot.slane %v70, %v74
  %v77 = vadd.f32 %v66, %v75
  %v78 = vadd.f32 %v67, %v75
  %v79 = vadd.f32 %v68, %v75
  %v80 = vadd.f32 %v69, %v75
  %v81 = vmul.f32 %v77, 0.5
  %v82 = vmul.f32 %v78, 0.5
  %v83 = vmul.f32 %v79, 0.5
  %v84 = vmul.f32 %v80, 0.5
  %v85 = vmul.f32 %v77, 0.044715
  %v86 = vmul.f32 %v78, 0.044715
  %v87 = vmul.f32 %v79, 0.044715
  %v88 = vmul.f32 %v80, 0.044715
  %v89 = vmul.f32 %v85, %v77
  %v90 = vmul.f32 %v86, %v78
  %v91 = vmul.f32 %v87, %v79
  %v92 = vmul.f32 %v88, %v80
  %v93 = vmul.f32 %v89, %v77
  %v94 = vmul.f32 %v90, %v78
  %v95 = vmul.f32 %v91, %v79
  %v96 = vmul.f32 %v92, %v80
  %v97 = vadd.f32 %v77, %v93
  %v98 = vadd.f32 %v78, %v94
  %v99 = vadd.f32 %v79, %v95
  %v100 = vadd.f32 %v80, %v96
  %v101 = vmul.f32 %v97, 0.7978846
  %v102 = vmul.f32 %v98, 0.7978846
  %v103 = vmul.f32 %v99, 0.7978846
  %v104 = vmul.f32 %v100, 0.7978846
  %v105 = vtanh.pop %v101
  %v106 = vtanh.pop %v102
  %v107 = vtanh.pop %v103
  %v108 = vtanh.pop %v104
  %v109 = vadd.f32 %v105, 1.0
  %v110 = vadd.f32 %v106, 1.0
  %v111 = vadd.f32 %v107, 1.0
  %v112 = vadd.f32 %v108, 1.0
  %v113 = vmul.f32 %v81, %v109
  %v114 = vmul.f32 %v82, %v110
  %v115 = vmul.f32 %v83, %v111
  %v116 = vmul.f32 %v84, %v112
  %vm117 = vcmask 523264
  %118 = vst.msk [vmem:[%s5] sm:$0xff] %vm117, %v113
  %119 = vst.msk [vmem:[%s5 + $0x8] sm:$0xff] %vm117, %v114
  %120 = vst.msk [vmem:[%s5 + $0x10] sm:$0xff] %vm117, %v115
  %121 = vst.msk [vmem:[%s5 + $0x18] sm:$0xff] %vm117, %v116
  %v122 = vld [vmem:[%s4] sm:$0x1]
  %v123 = vmul.f32 %v122, %v122
  %vm124 = vcmask 516096
  %v125 = vsel %vm124, %v123, 0.0
  %126 = vadd.xlane.f32.xlu0 %v125
  %v127 = vpop.xlane.xlu0 %126
  %v128 = vrsqrt.pop %v127
  %v130 = vlaneseq
  %v131 = vshrl.u32 %v130, 7
  %v132 = vsub.s32 0, %v131
  %v133 = vrot.slane %v122, %v132
  %v135 = vmul.f32 %v113, %v133
  %v136 = vmul.f32 %v114, %v133
  %v137 = vmul.f32 %v115, %v133
  %v138 = vmul.f32 %v116, %v133
  %v139 = vsel %vm117, %v135, 0.0
  %140 = vadd.xlane.f32.xlu0 %v139
  %v141 = vpop.xlane.xlu0 %140
  %v142 = vsel %vm117, %v136, 0.0
  %143 = vadd.xlane.f32.xlu0 %v142
  %v144 = vpop.xlane.xlu0 %143
  %v145 = vsel %vm117, %v137, 0.0
  %146 = vadd.xlane.f32.xlu0 %v145
  %v147 = vpop.xlane.xlu0 %146
  %v148 = vsel %vm117, %v138, 0.0
  %149 = vadd.xlane.f32.xlu0 %v148
  %v150 = vpop.xlane.xlu0 %149
  %v151 = vlaneseq
  %v152 = vshrl.u32 %v151, 7
  %v153 = vsub.s32 0, %v152
  %v154 = vrot.slane %v128, %v153
  %v155 = vmul.f32 %v141, %v154
  %v156 = vmul.f32 %v144, %v154
  %v157 = vmul.f32 %v147, %v154
  %v158 = vmul.f32 %v150, %v154
  %v159 = vtanh.pop %v155
  %v160 = vtanh.pop %v156
  %v161 = vtanh.pop %v157
  %v162 = vtanh.pop %v158
  %vm163 = vcmask 7168
  %164 = vst.msk [vmem:[%s6] sm:$0xff] %vm163, %v159
  %165 = vst.msk [vmem:[%s6 + $0x8] sm:$0xff] %vm163, %v160
  %166 = vst.msk [vmem:[%s6 + $0x10] sm:$0xff] %vm163, %v161
  %167 = vst.msk [vmem:[%s6 + $0x18] sm:$0xff] %vm163, %v162
  // Predicated region
  $region22: #{recognizer_spl_forward.19} parent=0 // pred_check
    _
  $region23: #{recognizer_spl_forward.19} parent=0 // pred_check_branch
    %169 = sbr.rel (0) target = $region25
  $region24: #{recognizer_spl_forward.19} parent=0 // pred_region
    _
  $region25: #{recognizer_spl_forward.19} parent=0 // pred_fallthru
    _
  // Predicated region
  $region26: #{recognizer_spl_forward.19} parent=0 // pred_check
    _
  $region27: #{recognizer_spl_forward.19} parent=0 // pred_check_branch
    %171 = sbr.rel (0) target = $region29
  $region28: #{recognizer_spl_forward.19} parent=0 // pred_region
    _
  $region29: #{recognizer_spl_forward.19} parent=0 // pred_fallthru
    _
  // Predicated region
  $region30: #{recognizer_spl_forward.19} parent=0 // pred_check
    _
  $region31: #{recognizer_spl_forward.19} parent=0 // pred_check_branch
    %173 = sbr.rel (0) target = $region33
  $region32: #{recognizer_spl_forward.19} parent=0 // pred_region
    _
  $region33: #{recognizer_spl_forward.19} parent=0 // pred_fallthru
    _
  // Predicated region
  $region34: #{recognizer_spl_forward.19} parent=0 // pred_check
    _
  $region35: #{recognizer_spl_forward.19} parent=0 // pred_check_branch
    %175 = sbr.rel (0) target = $region37
  $region36: #{recognizer_spl_forward.19} parent=0 // pred_region
    _
  $region37: #{recognizer_spl_forward.19} parent=0 // pred_fallthru
    _

// kernel: recognizer_spl_forward.18
$region0: #{recognizer_spl_forward.18}
  #allocation0 [shape = 'u32[]', space=smem, size = 0x4, offset = 0x4, fixed_abs, tag = 'smem constant byte address 0x4 - core index']
  #allocation1 [shape = 'u32[144,128]{1,0:T(1,128)}', space=vmem, size = 0x12000, scoped, tag = 'internal scratch']
  %s0 = inlined_call_operand.vmem [shape: f32[160,192], index: 0, kind: input, shape index: {}]
  %s1 = inlined_call_operand.vmem [shape: f32[160,1], index: 1, kind: input, shape index: {}]
  %s2 = inlined_call_operand.vmem [shape: f32[160,1], index: 2, kind: input, shape index: {}]
  %s3 = inlined_call_operand.vmem [shape: f32[160,64], index: 3, kind: output, shape index: {}]
  %s4 = sld [smem:[#allocation0]]
  $region22: #{recognizer_spl_forward.18} parent=0
    _
  %s6 = ssub.s32 1, %s4
  %s7 = scalar_select 0, %s6, %s4
  // Predicated region
  $region2: #{recognizer_spl_forward.18} parent=0 // pred_check
    _
  $region3: #{recognizer_spl_forward.18} parent=0 // pred_check_branch
    %9 = sbr.rel (0) target = $region5
  $region4: #{recognizer_spl_forward.18} parent=0 // pred_region
    _
  $region5: #{recognizer_spl_forward.18} parent=0 // pred_fallthru
    _
  // Predicated region
  $region6: #{recognizer_spl_forward.18} parent=0 // pred_check
    _
  $region7: #{recognizer_spl_forward.18} parent=0 // pred_check_branch
    %11 = sbr.rel (0) target = $region9
  $region8: #{recognizer_spl_forward.18} parent=0 // pred_region
    _
  $region9: #{recognizer_spl_forward.18} parent=0 // pred_fallthru
    _
  // Predicated region
  $region10: #{recognizer_spl_forward.18} parent=0 // pred_check
    _
  $region11: #{recognizer_spl_forward.18} parent=0 // pred_check_branch
    %13 = sbr.rel (0) target = $region13
  $region12: #{recognizer_spl_forward.18} parent=0 // pred_region
    _
  $region13: #{recognizer_spl_forward.18} parent=0 // pred_fallthru
    _
  %v14 = vld [vmem:[%s1] sm:$0xff]
  %v15 = vld [vmem:[%s1 + $0x8] sm:$0xff]
  %v16 = vld [vmem:[%s1 + $0x10] sm:$0xff]
  %v17 = vld [vmem:[%s1 + $0x18] sm:$0xff]
  %v18 = vld [vmem:[%s1 + $0x20] sm:$0xff]
  %v19 = vld [vmem:[%s1 + $0x28] sm:$0xff]
  %v20 = vld [vmem:[%s1 + $0x30] sm:$0xff]
  %v21 = vld [vmem:[%s1 + $0x38] sm:$0xff]
  %v22 = vld [vmem:[%s1 + $0x40] sm:$0xff]
  %v23 = vld [vmem:[%s1 + $0x48] sm:$0xff]
  %v24 = vld [vmem:[%s1 + $0x50] sm:$0xff]
  %v25 = vld [vmem:[%s1 + $0x58] sm:$0xff]
  %v26 = vld [vmem:[%s1 + $0x60] sm:$0xff]
  %v27 = vld [vmem:[%s1 + $0x68] sm:$0xff]
  %v28 = vld [vmem:[%s1 + $0x70] sm:$0xff]
  %v29 = vld [vmem:[%s1 + $0x78] sm:$0xff]
  %v30 = vld [vmem:[%s1 + $0x80] sm:$0xff]
  %v31 = vld [vmem:[%s1 + $0x88] sm:$0xff]
  %v32 = vld [vmem:[%s1 + $0x90] sm:$0xff]
  %v33 = vld [vmem:[%s1 + $0x98] sm:$0xff]
  %v34 = vmul.f32 %v14, 2.0
  %v35 = vmul.f32 %v15, 2.0
  %v36 = vmul.f32 %v16, 2.0
  %v37 = vmul.f32 %v17, 2.0
  %v38 = vmul.f32 %v18, 2.0
  %v39 = vmul.f32 %v19, 2.0
  %v40 = vmul.f32 %v20, 2.0
  %v41 = vmul.f32 %v21, 2.0
  %v42 = vmul.f32 %v22, 2.0
  %v43 = vmul.f32 %v23, 2.0
  %v44 = vmul.f32 %v24, 2.0
  %v45 = vmul.f32 %v25, 2.0
  %v46 = vmul.f32 %v26, 2.0
  %v47 = vmul.f32 %v27, 2.0
  %v48 = vmul.f32 %v28, 2.0
  %v49 = vmul.f32 %v29, 2.0
  %v50 = vmul.f32 %v30, 2.0
  %v51 = vmul.f32 %v31, 2.0
  %v52 = vmul.f32 %v32, 2.0
  %v53 = vmul.f32 %v33, 2.0
  %v54 = vld [vmem:[%s0] sm:$0xff]
  %v55 = vld [vmem:[%s0 + $0x8] sm:$0xff]
  %v56 = vld [vmem:[%s0 + $0x10] sm:$0xff]
  %v57 = vld [vmem:[%s0 + $0x18] sm:$0xff]
  %v58 = vld [vmem:[%s0 + $0x20] sm:$0xff]
  %v59 = vld [vmem:[%s0 + $0x28] sm:$0xff]
  %v60 = vld [vmem:[%s0 + $0x30] sm:$0xff]
  %v61 = vld [vmem:[%s0 + $0x38] sm:$0xff]
  %v62 = vld [vmem:[%s0 + $0x40] sm:$0xff]
  %v63 = vld [vmem:[%s0 + $0x48] sm:$0xff]
  %v64 = vld [vmem:[%s0 + $0x50] sm:$0xff]
  %v65 = vld [vmem:[%s0 + $0x58] sm:$0xff]
  %v66 = vld [vmem:[%s0 + $0x60] sm:$0xff]
  %v67 = vld [vmem:[%s0 + $0x68] sm:$0xff]
  %v68 = vld [vmem:[%s0 + $0x70] sm:$0xff]
  %v69 = vld [vmem:[%s0 + $0x78] sm:$0xff]
  %v70 = vld [vmem:[%s0 + $0x80] sm:$0xff]
  %v71 = vld [vmem:[%s0 + $0x88] sm:$0xff]
  %v72 = vld [vmem:[%s0 + $0x90] sm:$0xff]
  %v73 = vld [vmem:[%s0 + $0x98] sm:$0xff]
  %v74 = vld [vmem:[%s0 + $0xa0] sm:$0xff]
  %v75 = vld [vmem:[%s0 + $0xa8] sm:$0xff]
  %v76 = vld [vmem:[%s0 + $0xb0] sm:$0xff]
  %v77 = vld [vmem:[%s0 + $0xb8] sm:$0xff]
  %v78 = vld [vmem:[%s0 + $0xc0] sm:$0xff]
  %v79 = vld [vmem:[%s0 + $0xc8] sm:$0xff]
  %v80 = vld [vmem:[%s0 + $0xd0] sm:$0xff]
  %v81 = vld [vmem:[%s0 + $0xd8] sm:$0xff]
  %v82 = vld [vmem:[%s0 + $0xe0] sm:$0xff]
  %v83 = vld [vmem:[%s0 + $0xe8] sm:$0xff]
  %v84 = vld [vmem:[%s0 + $0xf0] sm:$0xff]
  %v85 = vld [vmem:[%s0 + $0xf8] sm:$0xff]
  %v86 = vld [vmem:[%s0 + $0x100] sm:$0xff]
  %v87 = vld [vmem:[%s0 + $0x108] sm:$0xff]
  %v88 = vld [vmem:[%s0 + $0x110] sm:$0xff]
  %v89 = vld [vmem:[%s0 + $0x118] sm:$0xff]
  %v90 = vld [vmem:[%s0 + $0x120] sm:$0xff]
  %v91 = vld [vmem:[%s0 + $0x128] sm:$0xff]
  %v92 = vld [vmem:[%s0 + $0x130] sm:$0xff]
  %v93 = vld [vmem:[%s0 + $0x138] sm:$0xff]
  %v94 = vand.u32 2147483647, %v34
  %v95 = vand.u32 2147483647, %v35
  %v96 = vand.u32 2147483647, %v36
  %v97 = vand.u32 2147483647, %v37
  %v98 = vand.u32 2147483647, %v38
  %v99 = vand.u32 2147483647, %v39
  %v100 = vand.u32 2147483647, %v40
  %v101 = vand.u32 2147483647, %v41
  %v102 = vand.u32 2147483647, %v42
  %v103 = vand.u32 2147483647, %v43
  %v104 = vand.u32 2147483647, %v44
  %v105 = vand.u32 2147483647, %v45
  %v106 = vand.u32 2147483647, %v46
  %v107 = vand.u32 2147483647, %v47
  %v108 = vand.u32 2147483647, %v48
  %v109 = vand.u32 2147483647, %v49
  %v110 = vand.u32 2147483647, %v50
  %v111 = vand.u32 2147483647, %v51
  %v112 = vand.u32 2147483647, %v52
  %v113 = vand.u32 2147483647, %v53
  %v114 = vsub.f32 1.0, %v94
  %v115 = vsub.f32 1.0, %v95
  %v116 = vsub.f32 1.0, %v96
  %v117 = vsub.f32 1.0, %v97
  %v118 = vsub.f32 1.0, %v98
  %v119 = vsub.f32 1.0, %v99
  %v120 = vsub.f32 1.0, %v100
  %v121 = vsub.f32 1.0, %v101
  %v122 = vsub.f32 1.0, %v102
  %v123 = vsub.f32 1.0, %v103
  %v124 = vsub.f32 1.0, %v104
  %v125 = vsub.f32 1.0, %v105
  %v126 = vsub.f32 1.0, %v106
  %v127 = vsub.f32 1.0, %v107
  %v128 = vsub.f32 1.0, %v108
  %v129 = vsub.f32 1.0, %v109
  %v130 = vsub.f32 1.0, %v110
  %v131 = vsub.f32 1.0, %v111
  %v132 = vsub.f32 1.0, %v112
  %v133 = vsub.f32 1.0, %v113
  %v134 = vmax.f32 %v114, 0.0
  %v135 = vmax.f32 %v115, 0.0
  %v136 = vmax.f32 %v116, 0.0
  %v137 = vmax.f32 %v117, 0.0
  %v138 = vmax.f32 %v118, 0.0
  %v139 = vmax.f32 %v119, 0.0
  %v140 = vmax.f32 %v120, 0.0
  %v141 = vmax.f32 %v121, 0.0
  %v142 = vmax.f32 %v122, 0.0
  %v143 = vmax.f32 %v123, 0.0
  %v144 = vmax.f32 %v124, 0.0
  %v145 = vmax.f32 %v125, 0.0
  %v146 = vmax.f32 %v126, 0.0
  %v147 = vmax.f32 %v127, 0.0
  %v148 = vmax.f32 %v128, 0.0
  %v149 = vmax.f32 %v129, 0.0
  %v150 = vmax.f32 %v130, 0.0
  %v151 = vmax.f32 %v131, 0.0
  %v152 = vmax.f32 %v132, 0.0
  %v153 = vmax.f32 %v133, 0.0
  %155 = vset.pattern.permute.xlu0 0
  %156 = vperm.xlu0 %155, %v134
  %v157 = vpop.permute.xlu0 %156
  %160 = vset.pattern.permute.xlu0 0
  %161 = vperm.xlu0 %160, %v135
  %v162 = vpop.permute.xlu0 %161
  %165 = vset.pattern.permute.xlu0 0
  %166 = vperm.xlu0 %165, %v136
  %v167 = vpop.permute.xlu0 %166
  %170 = vset.pattern.permute.xlu0 0
  %171 = vperm.xlu0 %170, %v137
  %v172 = vpop.permute.xlu0 %171
  %175 = vset.pattern.permute.xlu0 0
  %176 = vperm.xlu0 %175, %v138
  %v177 = vpop.permute.xlu0 %176
  %180 = vset.pattern.permute.xlu0 0
  %181 = vperm.xlu0 %180, %v139
  %v182 = vpop.permute.xlu0 %181
  %185 = vset.pattern.permute.xlu0 0
  %186 = vperm.xlu0 %185, %v140
  %v187 = vpop.permute.xlu0 %186
  %190 = vset.pattern.permute.xlu0 0
  %191 = vperm.xlu0 %190, %v141
  %v192 = vpop.permute.xlu0 %191
  %195 = vset.pattern.permute.xlu0 0
  %196 = vperm.xlu0 %195, %v142
  %v197 = vpop.permute.xlu0 %196
  %200 = vset.pattern.permute.xlu0 0
  %201 = vperm.xlu0 %200, %v143
  %v202 = vpop.permute.xlu0 %201
  %205 = vset.pattern.permute.xlu0 0
  %206 = vperm.xlu0 %205, %v144
  %v207 = vpop.permute.xlu0 %206
  %210 = vset.pattern.permute.xlu0 0
  %211 = vperm.xlu0 %210, %v145
  %v212 = vpop.permute.xlu0 %211
  %215 = vset.pattern.permute.xlu0 0
  %216 = vperm.xlu0 %215, %v146
  %v217 = vpop.permute.xlu0 %216
  %220 = vset.pattern.permute.xlu0 0
  %221 = vperm.xlu0 %220, %v147
  %v222 = vpop.permute.xlu0 %221
  %225 = vset.pattern.permute.xlu0 0
  %226 = vperm.xlu0 %225, %v148
  %v227 = vpop.permute.xlu0 %226
  %230 = vset.pattern.permute.xlu0 0
  %231 = vperm.xlu0 %230, %v149
  %v232 = vpop.permute.xlu0 %231
  %235 = vset.pattern.permute.xlu0 0
  %236 = vperm.xlu0 %235, %v150
  %v237 = vpop.permute.xlu0 %236
  %240 = vset.pattern.permute.xlu0 0
  %241 = vperm.xlu0 %240, %v151
  %v242 = vpop.permute.xlu0 %241
  %245 = vset.pattern.permute.xlu0 0
  %246 = vperm.xlu0 %245, %v152
  %v247 = vpop.permute.xlu0 %246
  %250 = vset.pattern.permute.xlu0 0
  %251 = vperm.xlu0 %250, %v153
  %v252 = vpop.permute.xlu0 %251
  %v254 = vmul.f32 %v157, %v54
  %v255 = vmul.f32 %v162, %v56
  %v256 = vmul.f32 %v167, %v58
  %v257 = vmul.f32 %v172, %v60
  %v258 = vmul.f32 %v177, %v62
  %v259 = vmul.f32 %v182, %v64
  %v260 = vmul.f32 %v187, %v66
  %v261 = vmul.f32 %v192, %v68
  %v262 = vmul.f32 %v197, %v70
  %v263 = vmul.f32 %v202, %v72
  %v264 = vmul.f32 %v207, %v74
  %v265 = vmul.f32 %v212, %v76
  %v266 = vmul.f32 %v217, %v78
  %v267 = vmul.f32 %v222, %v80
  %v268 = vmul.f32 %v227, %v82
  %v269 = vmul.f32 %v232, %v84
  %v270 = vmul.f32 %v237, %v86
  %v271 = vmul.f32 %v242, %v88
  %v272 = vmul.f32 %v247, %v90
  %v273 = vmul.f32 %v252, %v92
  %v274 = vadd.f32 %v254, 0.0
  %v275 = vadd.f32 %v255, 0.0
  %v276 = vadd.f32 %v256, 0.0
  %v277 = vadd.f32 %v257, 0.0
  %v278 = vadd.f32 %v258, 0.0
  %v279 = vadd.f32 %v259, 0.0
  %v280 = vadd.f32 %v260, 0.0
  %v281 = vadd.f32 %v261, 0.0
  %v282 = vadd.f32 %v262, 0.0
  %v283 = vadd.f32 %v263, 0.0
  %v284 = vadd.f32 %v264, 0.0
  %v285 = vadd.f32 %v265, 0.0
  %v286 = vadd.f32 %v266, 0.0
  %v287 = vadd.f32 %v267, 0.0
  %v288 = vadd.f32 %v268, 0.0
  %v289 = vadd.f32 %v269, 0.0
  %v290 = vadd.f32 %v270, 0.0
  %v291 = vadd.f32 %v271, 0.0
  %v292 = vadd.f32 %v272, 0.0
  %v293 = vadd.f32 %v273, 0.0
  %v294 = vsub.f32 %v34, 1.0
  %v295 = vsub.f32 %v35, 1.0
  %v296 = vsub.f32 %v36, 1.0
  %v297 = vsub.f32 %v37, 1.0
  %v298 = vsub.f32 %v38, 1.0
  %v299 = vsub.f32 %v39, 1.0
  %v300 = vsub.f32 %v40, 1.0
  %v301 = vsub.f32 %v41, 1.0
  %v302 = vsub.f32 %v42, 1.0
  %v303 = vsub.f32 %v43, 1.0
  %v304 = vsub.f32 %v44, 1.0
  %v305 = vsub.f32 %v45, 1.0
  %v306 = vsub.f32 %v46, 1.0
  %v307 = vsub.f32 %v47, 1.0
  %v308 = vsub.f32 %v48, 1.0
  %v309 = vsub.f32 %v49, 1.0
  %v310 = vsub.f32 %v50, 1.0
  %v311 = vsub.f32 %v51, 1.0
  %v312 = vsub.f32 %v52, 1.0
  %v313 = vsub.f32 %v53, 1.0
  %v314 = vand.u32 2147483647, %v294
  %v315 = vand.u32 2147483647, %v295
  %v316 = vand.u32 2147483647, %v296
  %v317 = vand.u32 2147483647, %v297
  %v318 = vand.u32 2147483647, %v298
  %v319 = vand.u32 2147483647, %v299
  %v320 = vand.u32 2147483647, %v300
  %v321 = vand.u32 2147483647, %v301
  %v322 = vand.u32 2147483647, %v302
  %v323 = vand.u32 2147483647, %v303
  %v324 = vand.u32 2147483647, %v304
  %v325 = vand.u32 2147483647, %v305
  %v326 = vand.u32 2147483647, %v306
  %v327 = vand.u32 2147483647, %v307
  %v328 = vand.u32 2147483647, %v308
  %v329 = vand.u32 2147483647, %v309
  %v330 = vand.u32 2147483647, %v310
  %v331 = vand.u32 2147483647, %v311
  %v332 = vand.u32 2147483647, %v312
  %v333 = vand.u32 2147483647, %v313
  %v334 = vsub.f32 1.0, %v314
  %v335 = vsub.f32 1.0, %v315
  %v336 = vsub.f32 1.0, %v316
  %v337 = vsub.f32 1.0, %v317
  %v338 = vsub.f32 1.0, %v318
  %v339 = vsub.f32 1.0, %v319
  %v340 = vsub.f32 1.0, %v320
  %v341 = vsub.f32 1.0, %v321
  %v342 = vsub.f32 1.0, %v322
  %v343 = vsub.f32 1.0, %v323
  %v344 = vsub.f32 1.0, %v324
  %v345 = vsub.f32 1.0, %v325
  %v346 = vsub.f32 1.0, %v326
  %v347 = vsub.f32 1.0, %v327
  %v348 = vsub.f32 1.0, %v328
  %v349 = vsub.f32 1.0, %v329
  %v350 = vsub.f32 1.0, %v330
  %v351 = vsub.f32 1.0, %v331
  %v352 = vsub.f32 1.0, %v332
  %v353 = vsub.f32 1.0, %v333
  %v354 = vmax.f32 %v334, 0.0
  %v355 = vmax.f32 %v335, 0.0
  %v356 = vmax.f32 %v336, 0.0
  %v357 = vmax.f32 %v337, 0.0
  %v358 = vmax.f32 %v338, 0.0
  %v359 = vmax.f32 %v339, 0.0
  %v360 = vmax.f32 %v340, 0.0
  %v361 = vmax.f32 %v341, 0.0
  %v362 = vmax.f32 %v342, 0.0
  %v363 = vmax.f32 %v343, 0.0
  %v364 = vmax.f32 %v344, 0.0
  %v365 = vmax.f32 %v345, 0.0
  %v366 = vmax.f32 %v346, 0.0
  %v367 = vmax.f32 %v347, 0.0
  %v368 = vmax.f32 %v348, 0.0
  %v369 = vmax.f32 %v349, 0.0
  %v370 = vmax.f32 %v350, 0.0
  %v371 = vmax.f32 %v351, 0.0
  %v372 = vmax.f32 %v352, 0.0
  %v373 = vmax.f32 %v353, 0.0
  %375 = vset.pattern.permute.xlu0 0
  %376 = vperm.xlu0 %375, %v354
  %v377 = vpop.permute.xlu0 %376
  %380 = vset.pattern.permute.xlu0 0
  %381 = vperm.xlu0 %380, %v355
  %v382 = vpop.permute.xlu0 %381
  %385 = vset.pattern.permute.xlu0 0
  %386 = vperm.xlu0 %385, %v356
  %v387 = vpop.permute.xlu0 %386
  %390 = vset.pattern.permute.xlu0 0
  %391 = vperm.xlu0 %390, %v357
  %v392 = vpop.permute.xlu0 %391
  %395 = vset.pattern.permute.xlu0 0
  %396 = vperm.xlu0 %395, %v358
  %v397 = vpop.permute.xlu0 %396
  %400 = vset.pattern.permute.xlu0 0
  %401 = vperm.xlu0 %400, %v359
  %v402 = vpop.permute.xlu0 %401
  %405 = vset.pattern.permute.xlu0 0
  %406 = vperm.xlu0 %405, %v360
  %v407 = vpop.permute.xlu0 %406
  %410 = vset.pattern.permute.xlu0 0
  %411 = vperm.xlu0 %410, %v361
  %v412 = vpop.permute.xlu0 %411
  %415 = vset.pattern.permute.xlu0 0
  %416 = vperm.xlu0 %415, %v362
  %v417 = vpop.permute.xlu0 %416
  %420 = vset.pattern.permute.xlu0 0
  %421 = vperm.xlu0 %420, %v363
  %v422 = vpop.permute.xlu0 %421
  %425 = vset.pattern.permute.xlu0 0
  %426 = vperm.xlu0 %425, %v364
  %v427 = vpop.permute.xlu0 %426
  %430 = vset.pattern.permute.xlu0 0
  %431 = vperm.xlu0 %430, %v365
  %v432 = vpop.permute.xlu0 %431
  %435 = vset.pattern.permute.xlu0 0
  %436 = vperm.xlu0 %435, %v366
  %v437 = vpop.permute.xlu0 %436
  %440 = vset.pattern.permute.xlu0 0
  %441 = vperm.xlu0 %440, %v367
  %v442 = vpop.permute.xlu0 %441
  %445 = vset.pattern.permute.xlu0 0
  %446 = vperm.xlu0 %445, %v368
  %v447 = vpop.permute.xlu0 %446
  %450 = vset.pattern.permute.xlu0 0
  %451 = vperm.xlu0 %450, %v369
  %v452 = vpop.permute.xlu0 %451
  %455 = vset.pattern.permute.xlu0 0
  %456 = vperm.xlu0 %455, %v370
  %v457 = vpop.permute.xlu0 %456
  %460 = vset.pattern.permute.xlu0 0
  %461 = vperm.xlu0 %460, %v371
  %v462 = vpop.permute.xlu0 %461
  %465 = vset.pattern.permute.xlu0 0
  %466 = vperm.xlu0 %465, %v372
  %v467 = vpop.permute.xlu0 %466
  %470 = vset.pattern.permute.xlu0 0
  %471 = vperm.xlu0 %470, %v373
  %v472 = vpop.permute.xlu0 %471
  %v474 = vmul.f32 %v377, %v54
  %v475 = vmul.f32 %v382, %v56
  %v476 = vmul.f32 %v387, %v58
  %v477 = vmul.f32 %v392, %v60
  %v478 = vmul.f32 %v397, %v62
  %v479 = vmul.f32 %v402, %v64
  %v480 = vmul.f32 %v407, %v66
  %v481 = vmul.f32 %v412, %v68
  %v482 = vmul.f32 %v417, %v70
  %v483 = vmul.f32 %v422, %v72
  %v484 = vmul.f32 %v427, %v74
  %v485 = vmul.f32 %v432, %v76
  %v486 = vmul.f32 %v437, %v78
  %v487 = vmul.f32 %v442, %v80
  %v488 = vmul.f32 %v447, %v82
  %v489 = vmul.f32 %v452, %v84
  %v490 = vmul.f32 %v457, %v86
  %v491 = vmul.f32 %v462, %v88
  %v492 = vmul.f32 %v467, %v90
  %v493 = vmul.f32 %v472, %v92
  %514 = vrot.lane.b32.xlu0 %v474, 64
  %v515 = vpop.permute.xlu0 %514
  %516 = vrot.lane.b32.xlu0 %v475, 64
  %v517 = vpop.permute.xlu0 %516
  %518 = vrot.lane.b32.xlu0 %v476, 64
  %v519 = vpop.permute.xlu0 %518
  %520 = vrot.lane.b32.xlu0 %v477, 64
  %v521 = vpop.permute.xlu0 %520
  %522 = vrot.lane.b32.xlu0 %v478, 64
  %v523 = vpop.permute.xlu0 %522
  %524 = vrot.lane.b32.xlu0 %v479, 64
  %v525 = vpop.permute.xlu0 %524
  %526 = vrot.lane.b32.xlu0 %v480, 64
  %v527 = vpop.permute.xlu0 %526
  %528 = vrot.lane.b32.xlu0 %v481, 64
  %v529 = vpop.permute.xlu0 %528
  %530 = vrot.lane.b32.xlu0 %v482, 64
  %v531 = vpop.permute.xlu0 %530
  %532 = vrot.lane.b32.xlu0 %v483, 64
  %v533 = vpop.permute.xlu0 %532
  %534 = vrot.lane.b32.xlu0 %v484, 64
  %v535 = vpop.permute.xlu0 %534
  %536 = vrot.lane.b32.xlu0 %v485, 64
  %v537 = vpop.permute.xlu0 %536
  %538 = vrot.lane.b32.xlu0 %v486, 64
  %v539 = vpop.permute.xlu0 %538
  %540 = vrot.lane.b32.xlu0 %v487, 64
  %v541 = vpop.permute.xlu0 %540
  %542 = vrot.lane.b32.xlu0 %v488, 64
  %v543 = vpop.permute.xlu0 %542
  %544 = vrot.lane.b32.xlu0 %v489, 64
  %v545 = vpop.permute.xlu0 %544
  %546 = vrot.lane.b32.xlu0 %v490, 64
  %v547 = vpop.permute.xlu0 %546
  %548 = vrot.lane.b32.xlu0 %v491, 64
  %v549 = vpop.permute.xlu0 %548
  %550 = vrot.lane.b32.xlu0 %v492, 64
  %v551 = vpop.permute.xlu0 %550
  %552 = vrot.lane.b32.xlu0 %v493, 64
  %v553 = vpop.permute.xlu0 %552
  %v574 = vadd.f32 %v274, %v515
  %v575 = vadd.f32 %v275, %v517
  %v576 = vadd.f32 %v276, %v519
  %v577 = vadd.f32 %v277, %v521
  %v578 = vadd.f32 %v278, %v523
  %v579 = vadd.f32 %v279, %v525
  %v580 = vadd.f32 %v280, %v527
  %v581 = vadd.f32 %v281, %v529
  %v582 = vadd.f32 %v282, %v531
  %v583 = vadd.f32 %v283, %v533
  %v584 = vadd.f32 %v284, %v535
  %v585 = vadd.f32 %v285, %v537
  %v586 = vadd.f32 %v286, %v539
  %v587 = vadd.f32 %v287, %v541
  %v588 = vadd.f32 %v288, %v543
  %v589 = vadd.f32 %v289, %v545
  %v590 = vadd.f32 %v290, %v547
  %v591 = vadd.f32 %v291, %v549
  %v592 = vadd.f32 %v292, %v551
  %v593 = vadd.f32 %v293, %v553
  %v594 = vsub.f32 %v34, 2.0
  %v595 = vsub.f32 %v35, 2.0
  %v596 = vsub.f32 %v36, 2.0
  %v597 = vsub.f32 %v37, 2.0
  %v598 = vsub.f32 %v38, 2.0
  %v599 = vsub.f32 %v39, 2.0
  %v600 = vsub.f32 %v40, 2.0
  %v601 = vsub.f32 %v41, 2.0
  %v602 = vsub.f32 %v42, 2.0
  %v603 = vsub.f32 %v43, 2.0
  %v604 = vsub.f32 %v44, 2.0
  %v605 = vsub.f32 %v45, 2.0
  %v606 = vsub.f32 %v46, 2.0
  %v607 = vsub.f32 %v47, 2.0
  %v608 = vsub.f32 %v48, 2.0
  %v609 = vsub.f32 %v49, 2.0
  %v610 = vsub.f32 %v50, 2.0
  %v611 = vsub.f32 %v51, 2.0
  %v612 = vsub.f32 %v52, 2.0
  %v613 = vsub.f32 %v53, 2.0
  %v614 = vand.u32 2147483647, %v594
  %v615 = vand.u32 2147483647, %v595
  %v616 = vand.u32 2147483647, %v596
  %v617 = vand.u32 2147483647, %v597
  %v618 = vand.u32 2147483647, %v598
  %v619 = vand.u32 2147483647, %v599
  %v620 = vand.u32 2147483647, %v600
  %v621 = vand.u32 2147483647, %v601
  %v622 = vand.u32 2147483647, %v602
  %v623 = vand.u32 2147483647, %v603
  %v624 = vand.u32 2147483647, %v604
  %v625 = vand.u32 2147483647, %v605
  %v626 = vand.u32 2147483647, %v606
  %v627 = vand.u32 2147483647, %v607
  %v628 = vand.u32 2147483647, %v608
  %v629 = vand.u32 2147483647, %v609
  %v630 = vand.u32 2147483647, %v610
  %v631 = vand.u32 2147483647, %v611
  %v632 = vand.u32 2147483647, %v612
  %v633 = vand.u32 2147483647, %v613
  %v634 = vsub.f32 1.0, %v614
  %v635 = vsub.f32 1.0, %v615
  %v636 = vsub.f32 1.0, %v616
  %v637 = vsub.f32 1.0, %v617
  %v638 = vsub.f32 1.0, %v618
  %v639 = vsub.f32 1.0, %v619
  %v640 = vsub.f32 1.0, %v620
  %v641 = vsub.f32 1.0, %v621
  %v642 = vsub.f32 1.0, %v622
  %v643 = vsub.f32 1.0, %v623
  %v644 = vsub.f32 1.0, %v624
  %v645 = vsub.f32 1.0, %v625
  %v646 = vsub.f32 1.0, %v626
  %v647 = vsub.f32 1.0, %v627
  %v648 = vsub.f32 1.0, %v628
  %v649 = vsub.f32 1.0, %v629
  %v650 = vsub.f32 1.0, %v630
  %v651 = vsub.f32 1.0, %v631
  %v652 = vsub.f32 1.0, %v632
  %v653 = vsub.f32 1.0, %v633
  %v654 = vmax.f32 %v634, 0.0
  %v655 = vmax.f32 %v635, 0.0
  %v656 = vmax.f32 %v636, 0.0
  %v657 = vmax.f32 %v637, 0.0
  %v658 = vmax.f32 %v638, 0.0
  %v659 = vmax.f32 %v639, 0.0
  %v660 = vmax.f32 %v640, 0.0
  %v661 = vmax.f32 %v641, 0.0
  %v662 = vmax.f32 %v642, 0.0
  %v663 = vmax.f32 %v643, 0.0
  %v664 = vmax.f32 %v644, 0.0
  %v665 = vmax.f32 %v645, 0.0
  %v666 = vmax.f32 %v646, 0.0
  %v667 = vmax.f32 %v647, 0.0
  %v668 = vmax.f32 %v648, 0.0
  %v669 = vmax.f32 %v649, 0.0
  %v670 = vmax.f32 %v650, 0.0
  %v671 = vmax.f32 %v651, 0.0
  %v672 = vmax.f32 %v652, 0.0
  %v673 = vmax.f32 %v653, 0.0
  %675 = vset.pattern.permute.xlu0 0
  %676 = vperm.xlu0 %675, %v654
  %v677 = vpop.permute.xlu0 %676
  %680 = vset.pattern.permute.xlu0 0
  %681 = vperm.xlu0 %680, %v655
  %v682 = vpop.permute.xlu0 %681
  %685 = vset.pattern.permute.xlu0 0
  %686 = vperm.xlu0 %685, %v656
  %v687 = vpop.permute.xlu0 %686
  %690 = vset.pattern.permute.xlu0 0
  %691 = vperm.xlu0 %690, %v657
  %v692 = vpop.permute.xlu0 %691
  %695 = vset.pattern.permute.xlu0 0
  %696 = vperm.xlu0 %695, %v658
  %v697 = vpop.permute.xlu0 %696
  %700 = vset.pattern.permute.xlu0 0
  %701 = vperm.xlu0 %700, %v659
  %v702 = vpop.permute.xlu0 %701
  %705 = vset.pattern.permute.xlu0 0
  %706 = vperm.xlu0 %705, %v660
  %v707 = vpop.permute.xlu0 %706
  %710 = vset.pattern.permute.xlu0 0
  %711 = vperm.xlu0 %710, %v661
  %v712 = vpop.permute.xlu0 %711
  %715 = vset.pattern.permute.xlu0 0
  %716 = vperm.xlu0 %715, %v662
  %v717 = vpop.permute.xlu0 %716
  %720 = vset.pattern.permute.xlu0 0
  %721 = vperm.xlu0 %720, %v663
  %v722 = vpop.permute.xlu0 %721
  %725 = vset.pattern.permute.xlu0 0
  %726 = vperm.xlu0 %725, %v664
  %v727 = vpop.permute.xlu0 %726
  %730 = vset.pattern.permute.xlu0 0
  %731 = vperm.xlu0 %730, %v665
  %v732 = vpop.permute.xlu0 %731
  %735 = vset.pattern.permute.xlu0 0
  %736 = vperm.xlu0 %735, %v666
  %v737 = vpop.permute.xlu0 %736
  %740 = vset.pattern.permute.xlu0 0
  %741 = vperm.xlu0 %740, %v667
  %v742 = vpop.permute.xlu0 %741
  %745 = vset.pattern.permute.xlu0 0
  %746 = vperm.xlu0 %745, %v668
  %v747 = vpop.permute.xlu0 %746
  %750 = vset.pattern.permute.xlu0 0
  %751 = vperm.xlu0 %750, %v669
  %v752 = vpop.permute.xlu0 %751
  %755 = vset.pattern.permute.xlu0 0
  %756 = vperm.xlu0 %755, %v670
  %v757 = vpop.permute.xlu0 %756
  %760 = vset.pattern.permute.xlu0 0
  %761 = vperm.xlu0 %760, %v671
  %v762 = vpop.permute.xlu0 %761
  %765 = vset.pattern.permute.xlu0 0
  %766 = vperm.xlu0 %765, %v672
  %v767 = vpop.permute.xlu0 %766
  %770 = vset.pattern.permute.xlu0 0
  %771 = vperm.xlu0 %770, %v673
  %v772 = vpop.permute.xlu0 %771
  %v774 = vmul.f32 %v677, %v55
  %v775 = vmul.f32 %v682, %v57
  %v776 = vmul.f32 %v687, %v59
  %v777 = vmul.f32 %v692, %v61
  %v778 = vmul.f32 %v697, %v63
  %v779 = vmul.f32 %v702, %v65
  %v780 = vmul.f32 %v707, %v67
  %v781 = vmul.f32 %v712, %v69
  %v782 = vmul.f32 %v717, %v71
  %v783 = vmul.f32 %v722, %v73
  %v784 = vmul.f32 %v727, %v75
  %v785 = vmul.f32 %v732, %v77
  %v786 = vmul.f32 %v737, %v79
  %v787 = vmul.f32 %v742, %v81
  %v788 = vmul.f32 %v747, %v83
  %v789 = vmul.f32 %v752, %v85
  %v790 = vmul.f32 %v757, %v87
  %v791 = vmul.f32 %v762, %v89
  %v792 = vmul.f32 %v767, %v91
  %v793 = vmul.f32 %v772, %v93
  %v794 = vadd.f32 %v574, %v774
  %v795 = vadd.f32 %v575, %v775
  %v796 = vadd.f32 %v576, %v776
  %v797 = vadd.f32 %v577, %v777
  %v798 = vadd.f32 %v578, %v778
  %v799 = vadd.f32 %v579, %v779
  %v800 = vadd.f32 %v580, %v780
  %v801 = vadd.f32 %v581, %v781
  %v802 = vadd.f32 %v582, %v782
  %v803 = vadd.f32 %v583, %v783
  %v804 = vadd.f32 %v584, %v784
  %v805 = vadd.f32 %v585, %v785
  %v806 = vadd.f32 %v586, %v786
  %v807 = vadd.f32 %v587, %v787
  %v808 = vadd.f32 %v588, %v788
  %v809 = vadd.f32 %v589, %v789
  %v810 = vadd.f32 %v590, %v790
  %v811 = vadd.f32 %v591, %v791
  %v812 = vadd.f32 %v592, %v792
  %v813 = vadd.f32 %v593, %v793
  %v814 = vld [vmem:[%s2] sm:$0xff]
  %v815 = vld [vmem:[%s2 + $0x8] sm:$0xff]
  %v816 = vld [vmem:[%s2 + $0x10] sm:$0xff]
  %v817 = vld [vmem:[%s2 + $0x18] sm:$0xff]
  %v818 = vld [vmem:[%s2 + $0x20] sm:$0xff]
  %v819 = vld [vmem:[%s2 + $0x28] sm:$0xff]
  %v820 = vld [vmem:[%s2 + $0x30] sm:$0xff]
  %v821 = vld [vmem:[%s2 + $0x38] sm:$0xff]
  %v822 = vld [vmem:[%s2 + $0x40] sm:$0xff]
  %v823 = vld [vmem:[%s2 + $0x48] sm:$0xff]
  %v824 = vld [vmem:[%s2 + $0x50] sm:$0xff]
  %v825 = vld [vmem:[%s2 + $0x58] sm:$0xff]
  %v826 = vld [vmem:[%s2 + $0x60] sm:$0xff]
  %v827 = vld [vmem:[%s2 + $0x68] sm:$0xff]
  %v828 = vld [vmem:[%s2 + $0x70] sm:$0xff]
  %v829 = vld [vmem:[%s2 + $0x78] sm:$0xff]
  %v830 = vld [vmem:[%s2 + $0x80] sm:$0xff]
  %v831 = vld [vmem:[%s2 + $0x88] sm:$0xff]
  %v832 = vld [vmem:[%s2 + $0x90] sm:$0xff]
  %v833 = vld [vmem:[%s2 + $0x98] sm:$0xff]
  %835 = vset.pattern.permute.xlu0 0
  %836 = vperm.xlu0 %835, %v814
  %v837 = vpop.permute.xlu0 %836
  %840 = vset.pattern.permute.xlu0 0
  %841 = vperm.xlu0 %840, %v815
  %v842 = vpop.permute.xlu0 %841
  %845 = vset.pattern.permute.xlu0 0
  %846 = vperm.xlu0 %845, %v816
  %v847 = vpop.permute.xlu0 %846
  %850 = vset.pattern.permute.xlu0 0
  %851 = vperm.xlu0 %850, %v817
  %v852 = vpop.permute.xlu0 %851
  %855 = vset.pattern.permute.xlu0 0
  %856 = vperm.xlu0 %855, %v818
  %v857 = vpop.permute.xlu0 %856
  %860 = vset.pattern.permute.xlu0 0
  %861 = vperm.xlu0 %860, %v819
  %v862 = vpop.permute.xlu0 %861
  %865 = vset.pattern.permute.xlu0 0
  %866 = vperm.xlu0 %865, %v820
  %v867 = vpop.permute.xlu0 %866
  %870 = vset.pattern.permute.xlu0 0
  %871 = vperm.xlu0 %870, %v821
  %v872 = vpop.permute.xlu0 %871
  %875 = vset.pattern.permute.xlu0 0
  %876 = vperm.xlu0 %875, %v822
  %v877 = vpop.permute.xlu0 %876
  %880 = vset.pattern.permute.xlu0 0
  %881 = vperm.xlu0 %880, %v823
  %v882 = vpop.permute.xlu0 %881
  %885 = vset.pattern.permute.xlu0 0
  %886 = vperm.xlu0 %885, %v824
  %v887 = vpop.permute.xlu0 %886
  %890 = vset.pattern.permute.xlu0 0
  %891 = vperm.xlu0 %890, %v825
  %v892 = vpop.permute.xlu0 %891
  %895 = vset.pattern.permute.xlu0 0
  %896 = vperm.xlu0 %895, %v826
  %v897 = vpop.permute.xlu0 %896
  %900 = vset.pattern.permute.xlu0 0
  %901 = vperm.xlu0 %900, %v827
  %v902 = vpop.permute.xlu0 %901
  %905 = vset.pattern.permute.xlu0 0
  %906 = vperm.xlu0 %905, %v828
  %v907 = vpop.permute.xlu0 %906
  %910 = vset.pattern.permute.xlu0 0
  %911 = vperm.xlu0 %910, %v829
  %v912 = vpop.permute.xlu0 %911
  %915 = vset.pattern.permute.xlu0 0
  %916 = vperm.xlu0 %915, %v830
  %v917 = vpop.permute.xlu0 %916
  %920 = vset.pattern.permute.xlu0 0
  %921 = vperm.xlu0 %920, %v831
  %v922 = vpop.permute.xlu0 %921
  %925 = vset.pattern.permute.xlu0 0
  %926 = vperm.xlu0 %925, %v832
  %v927 = vpop.permute.xlu0 %926
  %930 = vset.pattern.permute.xlu0 0
  %931 = vperm.xlu0 %930, %v833
  %v932 = vpop.permute.xlu0 %931
  %v934 = vmul.f32 %v794, %v837
  %v935 = vmul.f32 %v795, %v842
  %v936 = vmul.f32 %v796, %v847
  %v937 = vmul.f32 %v797, %v852
  %v938 = vmul.f32 %v798, %v857
  %v939 = vmul.f32 %v799, %v862
  %v940 = vmul.f32 %v800, %v867
  %v941 = vmul.f32 %v801, %v872
  %v942 = vmul.f32 %v802, %v877
  %v943 = vmul.f32 %v803, %v882
  %v944 = vmul.f32 %v804, %v887
  %v945 = vmul.f32 %v805, %v892
  %v946 = vmul.f32 %v806, %v897
  %v947 = vmul.f32 %v807, %v902
  %v948 = vmul.f32 %v808, %v907
  %v949 = vmul.f32 %v809, %v912
  %v950 = vmul.f32 %v810, %v917
  %v951 = vmul.f32 %v811, %v922
  %v952 = vmul.f32 %v812, %v927
  %v953 = vmul.f32 %v813, %v932
  %vm954 = vcmask 523264
  %955 = vst.msk [vmem:[%s3] sm:$0xff] %vm954, %v934
  %956 = vst.msk [vmem:[%s3 + $0x8] sm:$0xff] %vm954, %v935
  %957 = vst.msk [vmem:[%s3 + $0x10] sm:$0xff] %vm954, %v936
  %958 = vst.msk [vmem:[%s3 + $0x18] sm:$0xff] %vm954, %v937
  %959 = vst.msk [vmem:[%s3 + $0x20] sm:$0xff] %vm954, %v938
  %960 = vst.msk [vmem:[%s3 + $0x28] sm:$0xff] %vm954, %v939
  %961 = vst.msk [vmem:[%s3 + $0x30] sm:$0xff] %vm954, %v940
  %962 = vst.msk [vmem:[%s3 + $0x38] sm:$0xff] %vm954, %v941
  %963 = vst.msk [vmem:[%s3 + $0x40] sm:$0xff] %vm954, %v942
  %964 = vst.msk [vmem:[%s3 + $0x48] sm:$0xff] %vm954, %v943
  %965 = vst.msk [vmem:[%s3 + $0x50] sm:$0xff] %vm954, %v944
  %966 = vst.msk [vmem:[%s3 + $0x58] sm:$0xff] %vm954, %v945
  %967 = vst.msk [vmem:[%s3 + $0x60] sm:$0xff] %vm954, %v946
  %968 = vst.msk [vmem:[%s3 + $0x68] sm:$0xff] %vm954, %v947
  %969 = vst.msk [vmem:[%s3 + $0x70] sm:$0xff] %vm954, %v948
  %970 = vst.msk [vmem:[%s3 + $0x78] sm:$0xff] %vm954, %v949
  %971 = vst.msk [vmem:[%s3 + $0x80] sm:$0xff] %vm954, %v950
  %972 = vst.msk [vmem:[%s3 + $0x88] sm:$0xff] %vm954, %v951
  %973 = vst.msk [vmem:[%s3 + $0x90] sm:$0xff] %vm954, %v952
  %974 = vst.msk [vmem:[%s3 + $0x98] sm:$0xff] %vm954, %v953
  // Predicated region
  $region14: #{recognizer_spl_forward.18} parent=0 // pred_check
    _
  $region15: #{recognizer_spl_forward.18} parent=0 // pred_check_branch
    %976 = sbr.rel (0) target = $region17
  $region16: #{recognizer_spl_forward.18} parent=0 // pred_region
    _
  $region17: #{recognizer_spl_forward.18} parent=0 // pred_fallthru
    _
  // Predicated region
  $region18: #{recognizer_spl_forward.18} parent=0 // pred_check
    _
  $region19: #{recognizer_spl_forward.18} parent=0 // pred_check_branch
    %978 = sbr.rel (0) target = $region21
  $region20: #{recognizer_spl_forward.18} parent=0 // pred_region
    _
  $region21: #{recognizer_spl_forward.18} parent=0 // pred_fallthru
    _

// kernel: mul.52
$region0: #{mul.52}
  #allocation0 [shape = 's32[1]{0}', space=sflag, size = 0x4, scoped, tag = 'scoped memory for mul.52']
  %s0 = inlined_call_operand.vmem [shape: f32[160,1], index: 0, kind: input, shape index: {}]
  %s1 = inlined_call_operand.vmem [shape: f32[160,1], index: 1, kind: input, shape index: {}]
  %s2 = inlined_call_operand.vmem [shape: f32[160,1], index: 2, kind: output, shape index: {}]
  %v3 = vld [vmem:[%s0] sm:$0x1]
  %v4 = vld [vmem:[%s1] sm:$0x1]
  %5 = xla_tuple %v3, %v4
  %6 = xla_tuple %5
  %v7 = vmul.f32 %v3, %v4
  %8 = xla_tuple %v7
  %9 = vst [vmem:[%s2] sm:$0x1] %v7
  %s10 = scalar_lea.vmem %s0, 1
  %v11 = vld [vmem:[%s10] sm:$0x1]
  %s12 = scalar_lea.vmem %s1, 1
  %v13 = vld [vmem:[%s12] sm:$0x1]
  %14 = xla_tuple %v11, %v13
  %15 = xla_tuple %14
  %v16 = vmul.f32 %v11, %v13
  %17 = xla_tuple %v16
  %s18 = scalar_lea.vmem %s2, 1
  %19 = vst [vmem:[%s18] sm:$0x1] %v16

// kernel: recognizer_spl_forward.21
$region0: #{recognizer_spl_forward.21}
  #allocation0 [shape = 'u32[]', space=smem, size = 0x4, offset = 0x4, fixed_abs, tag = 'smem constant byte address 0x4 - core index']
  #allocation1 [shape = 'u32[144,128]{1,0:T(1,128)}', space=vmem, size = 0x12000, scoped, tag = 'internal scratch']
  %s0 = inlined_call_operand.vmem [shape: f32[32,64], index: 0, kind: input, shape index: {}]
  %s1 = inlined_call_operand.vmem [shape: f32[64,256], index: 1, kind: input, shape index: {}]
  %s2 = inlined_call_operand.vmem [shape: f32[32,256], index: 2, kind: output, shape index: {}]
  %s3 = sld [smem:[#allocation0]]
  $region18: #{recognizer_spl_forward.21} parent=0
    _
  %s5 = ssub.s32 1, %s3
  %s6 = scalar_select 0, %s5, %s3
  // Predicated region
  $region2: #{recognizer_spl_forward.21} parent=0 // pred_check
    _
  $region3: #{recognizer_spl_forward.21} parent=0 // pred_check_branch
    %8 = sbr.rel (0) target = $region5
  $region4: #{recognizer_spl_forward.21} parent=0 // pred_region
    _
  $region5: #{recognizer_spl_forward.21} parent=0 // pred_fallthru
    _
  // Predicated region
  $region6: #{recognizer_spl_forward.21} parent=0 // pred_check
    _
  $region7: #{recognizer_spl_forward.21} parent=0 // pred_check_branch
    %10 = sbr.rel (0) target = $region9
  $region8: #{recognizer_spl_forward.21} parent=0 // pred_region
    _
  $region9: #{recognizer_spl_forward.21} parent=0 // pred_fallthru
    _
  %v12 = vld [vmem:[%s0] sm:$0xff]
  %v13 = vld [vmem:[%s0 + $0x8] sm:$0xff]
  %v14 = vld [vmem:[%s0 + $0x10] sm:$0xff]
  %v15 = vld [vmem:[%s0 + $0x18] sm:$0xff]
  %v16 = vld [vmem:[%s1] sm:$0xff]
  %v17 = vld [vmem:[%s1 + $0x8] sm:$0xff]
  %v18 = vld [vmem:[%s1 + $0x10] sm:$0xff]
  %v19 = vld [vmem:[%s1 + $0x18] sm:$0xff]
  %v20 = vld [vmem:[%s1 + $0x20] sm:$0xff]
  %v21 = vld [vmem:[%s1 + $0x28] sm:$0xff]
  %v22 = vld [vmem:[%s1 + $0x30] sm:$0xff]
  %v23 = vld [vmem:[%s1 + $0x38] sm:$0xff]
  %v24 = vld [vmem:[%s1 + $0x40] sm:$0xff]
  %v25 = vld [vmem:[%s1 + $0x48] sm:$0xff]
  %v26 = vld [vmem:[%s1 + $0x50] sm:$0xff]
  %v27 = vld [vmem:[%s1 + $0x58] sm:$0xff]
  %v28 = vld [vmem:[%s1 + $0x60] sm:$0xff]
  %v29 = vld [vmem:[%s1 + $0x68] sm:$0xff]
  %v30 = vld [vmem:[%s1 + $0x70] sm:$0xff]
  %v31 = vld [vmem:[%s1 + $0x78] sm:$0xff]
  %v32 = vpack.c.bf16 %v13, %v12
  %v33 = vpack.c.bf16 %v15, %v14
  %v34 = vpack.c.bf16 %v18, %v16
  %v35 = vpack.c.bf16 %v19, %v17
  %v36 = vpack.c.bf16 %v22, %v20
  %v37 = vpack.c.bf16 %v23, %v21
  %v38 = vpack.c.bf16 %v26, %v24
  %v39 = vpack.c.bf16 %v27, %v25
  %v40 = vpack.c.bf16 %v30, %v28
  %v41 = vpack.c.bf16 %v31, %v29
  %vm42 = vcmask 523264
  %v44 = vsel %vm42, %v32, 0
  %v47 = vsel %vm42, %v33, 0
  %49 = vmatprep.subr.bf16.mxu0 %v35
  %50 = vmatpush1.bf16.msra.mxu0 %v34
  %51 = vmatprep.subr.bf16.mxu0 %v37
  %52 = vmatpush1.bf16.msra.mxu0 %v36
  %53 = vmatprep.subr.bf16.mxu0 %v39
  %54 = vmatpush1.bf16.msra.mxu0 %v38
  %55 = vmatprep.subr.bf16.mxu0 %v41
  %56 = vmatpush1.bf16.msra.mxu0 %v40
  %57 = vmatprep.subr.bf16.mxu0 0
  %58 = vmatpush1.bf16.msra.mxu0 0
  %59 = vmatprep.subr.bf16.mxu0 0
  %60 = vmatpush1.bf16.msra.mxu0 0
  %61 = vmatprep.subr.bf16.mxu0 0
  %62 = vmatpush1.bf16.msra.mxu0 0
  %63 = vmatprep.subr.bf16.mxu0 0
  %64 = vmatpush1.bf16.msra.mxu0 0
  %65 = vmatprep.subr.bf16.mxu0 0
  %66 = vmatpush1.bf16.msra.mxu0 0
  %67 = vmatprep.subr.bf16.mxu0 0
  %68 = vmatpush1.bf16.msra.mxu0 0
  %69 = vmatprep.subr.bf16.mxu0 0
  %70 = vmatpush1.bf16.msra.mxu0 0
  %71 = vmatprep.subr.bf16.mxu0 0
  %72 = vmatpush1.bf16.msra.mxu0 0
  %73 = vmatprep.subr.bf16.mxu0 0
  %74 = vmatpush1.bf16.msra.mxu0 0
  %75 = vmatprep.subr.bf16.mxu0 0
  %76 = vmatpush1.bf16.msra.mxu0 0
  %77 = vmatprep.subr.bf16.mxu0 0
  %78 = vmatpush1.bf16.msra.mxu0 0
  %79 = vmatprep.subr.bf16.mxu0 0
  %80 = vmatpush1.bf16.msra.mxu0 0
  %81 = vmatprep.mubr.bf16.mxu0 0
  %82 = vmatmul.mubr.bf16.gmra.mrb[0].mxu0 %v44
  %v83 = vpop.f32.mrb[0].mxu0
  %v84 = vadd.f32 0.0, %v83
  %v85 = vpop.f32.mrb[0].mxu0
  %v86 = vadd.f32 0.0, %v85
  %v87 = vpop.f32.mrb[0].mxu0
  %v88 = vadd.f32 0.0, %v87
  %v89 = vpop.f32.mrb[0].mxu0
  %v90 = vadd.f32 0.0, %v89
  %91 = vmatprep.mubr.bf16.mxu0 0
  %92 = vmatmul.mubr.bf16.gmra.mrb[0].mxu0 %v47
  %v93 = vpop.f32.mrb[0].mxu0
  %v94 = vadd.f32 0.0, %v93
  %v95 = vpop.f32.mrb[0].mxu0
  %v96 = vadd.f32 0.0, %v95
  %v97 = vpop.f32.mrb[0].mxu0
  %v98 = vadd.f32 0.0, %v97
  %v99 = vpop.f32.mrb[0].mxu0
  %v100 = vadd.f32 0.0, %v99
  %101 = vdwg.mxu0
  %102 = vst [vmem:[%s2] sm:$0xff] %v84
  %103 = vst [vmem:[%s2 + $0x8] sm:$0xff] %v86
  %104 = vst [vmem:[%s2 + $0x10] sm:$0xff] %v88
  %105 = vst [vmem:[%s2 + $0x18] sm:$0xff] %v90
  %106 = vst [vmem:[%s2 + $0x20] sm:$0xff] %v94
  %107 = vst [vmem:[%s2 + $0x28] sm:$0xff] %v96
  %108 = vst [vmem:[%s2 + $0x30] sm:$0xff] %v98
  %109 = vst [vmem:[%s2 + $0x38] sm:$0xff] %v100
  // Predicated region
  $region10: #{recognizer_spl_forward.21} parent=0 // pred_check
    _
  $region11: #{recognizer_spl_forward.21} parent=0 // pred_check_branch
    %111 = sbr.rel (0) target = $region13
  $region12: #{recognizer_spl_forward.21} parent=0 // pred_region
    _
  $region13: #{recognizer_spl_forward.21} parent=0 // pred_fallthru
    _
  // Predicated region
  $region14: #{recognizer_spl_forward.21} parent=0 // pred_check
    _
  $region15: #{recognizer_spl_forward.21} parent=0 // pred_check_branch
    %113 = sbr.rel (0) target = $region17
  $region16: #{recognizer_spl_forward.21} parent=0 // pred_region
    _
  $region17: #{recognizer_spl_forward.21} parent=0 // pred_fallthru
    _

// kernel: recognizer_spl_forward.28
$region0: #{recognizer_spl_forward.28}
  #allocation0 [shape = 'u32[]', space=smem, size = 0x4, offset = 0x4, fixed_abs, tag = 'smem constant byte address 0x4 - core index']
  #allocation1 [shape = 'u32[144,128]{1,0:T(1,128)}', space=vmem, size = 0x12000, scoped, tag = 'internal scratch']
  %s0 = inlined_call_operand.vmem [shape: f32[32,64], index: 0, kind: input, shape index: {}]
  %s1 = inlined_call_operand.vmem [shape: f32[32,2], index: 1, kind: input, shape index: {}]
  %s2 = inlined_call_operand.vmem [shape: f32[2,128], index: 2, kind: output, shape index: {}]
  %s3 = sld [smem:[#allocation0]]
  $region18: #{recognizer_spl_forward.28} parent=0
    _
  %s5 = ssub.s32 1, %s3
  %s6 = scalar_select 0, %s5, %s3
  // Predicated region
  $region2: #{recognizer_spl_forward.28} parent=0 // pred_check
    _
  $region3: #{recognizer_spl_forward.28} parent=0 // pred_check_branch
    %8 = sbr.rel (0) target = $region5
  $region4: #{recognizer_spl_forward.28} parent=0 // pred_region
    _
  $region5: #{recognizer_spl_forward.28} parent=0 // pred_fallthru
    _
  // Predicated region
  $region6: #{recognizer_spl_forward.28} parent=0 // pred_check
    _
  $region7: #{recognizer_spl_forward.28} parent=0 // pred_check_branch
    %10 = sbr.rel (0) target = $region9
  $region8: #{recognizer_spl_forward.28} parent=0 // pred_region
    _
  $region9: #{recognizer_spl_forward.28} parent=0 // pred_fallthru
    _
  %v11 = vld [vmem:[%s0] sm:$0xff]
  %v12 = vld [vmem:[%s0 + $0x8] sm:$0xff]
  %v13 = vld [vmem:[%s0 + $0x10] sm:$0xff]
  %v14 = vld [vmem:[%s0 + $0x18] sm:$0xff]
  %v15 = vld [vmem:[%s1] sm:$0xff]
  %v16 = vld [vmem:[%s1 + $0x8] sm:$0xff]
  %v17 = vld [vmem:[%s1 + $0x10] sm:$0xff]
  %v18 = vld [vmem:[%s1 + $0x18] sm:$0xff]
  %vm19 = vcmask 7168
  %v20 = vsel %vm19, %v15, 0.0
  %v21 = vsel %vm19, %v16, 0.0
  %v22 = vadd.f32 %v20, %v21
  %v23 = vsel %vm19, %v17, 0.0
  %v24 = vadd.f32 %v22, %v23
  %v25 = vsel %vm19, %v18, 0.0
  %v26 = vadd.f32 %v24, %v25
  %v27 = vrot.slane %v26, 4
  %v28 = vadd.f32 %v26, %v27
  %v29 = vrot.slane %v28, 2
  %v30 = vadd.f32 %v28, %v29
  %v31 = vrot.slane %v30, 1
  %v32 = vadd.f32 %v30, %v31
  %34 = vset.pattern.permute.xlu0 0
  %35 = vperm.xlu0 %34, %v15
  %v36 = vpop.permute.xlu0 %35
  %39 = vset.pattern.permute.xlu0 0
  %40 = vperm.xlu0 %39, %v16
  %v41 = vpop.permute.xlu0 %40
  %44 = vset.pattern.permute.xlu0 0
  %45 = vperm.xlu0 %44, %v17
  %v46 = vpop.permute.xlu0 %45
  %49 = vset.pattern.permute.xlu0 0
  %50 = vperm.xlu0 %49, %v18
  %v51 = vpop.permute.xlu0 %50
  %v53 = vmul.f32 %v36, %v11
  %v54 = vmul.f32 %v41, %v12
  %v55 = vmul.f32 %v46, %v13
  %v56 = vmul.f32 %v51, %v14
  %vm57 = vcmask 523264
  %v58 = vsel %vm57, %v53, 0.0
  %v59 = vsel %vm57, %v54, 0.0
  %v60 = vadd.f32 %v58, %v59
  %v61 = vsel %vm57, %v55, 0.0
  %v62 = vadd.f32 %v60, %v61
  %v63 = vsel %vm57, %v56, 0.0
  %v64 = vadd.f32 %v62, %v63
  %v65 = vrot.slane %v64, 4
  %v66 = vadd.f32 %v64, %v65
  %v67 = vrot.slane %v66, 2
  %v68 = vadd.f32 %v66, %v67
  %v69 = vrot.slane %v68, 1
  %v70 = vadd.f32 %v68, %v69
  %v71 = vmax.f32 %v32, 1.0
  %v72 = vrcp.pop %v71
  %74 = vset.pattern.permute.xlu0 0
  %75 = vperm.xlu0 %74, %v72
  %v76 = vpop.permute.xlu0 %75
  %v78 = vmul.f32 %v70, %v76
  %vm79 = vcmp.gt.f32.partialorder %v15, 0.5
  %vm80 = vcmp.gt.f32.partialorder %v16, 0.5
  %vm81 = vcmp.gt.f32.partialorder %v17, 0.5
  %vm82 = vcmp.gt.f32.partialorder %v18, 0.5
  %v83 = vsel %vm79, 1, 0
  %v84 = vsel %vm80, 1, 0
  %v85 = vsel %vm81, 1, 0
  %v86 = vsel %vm82, 1, 0
  %87 = vset.pattern.permute.xlu0 0
  %88 = vperm.xlu0 %87, %v83
  %v89 = vpop.permute.xlu0 %88
  %90 = vset.pattern.permute.xlu0 0
  %91 = vperm.xlu0 %90, %v84
  %v92 = vpop.permute.xlu0 %91
  %93 = vset.pattern.permute.xlu0 0
  %94 = vperm.xlu0 %93, %v85
  %v95 = vpop.permute.xlu0 %94
  %96 = vset.pattern.permute.xlu0 0
  %97 = vperm.xlu0 %96, %v86
  %v98 = vpop.permute.xlu0 %97
  %vm99 = vcmp.eq.s32.totalorder %v89, 1
  %vm100 = vcmp.eq.s32.totalorder %v92, 1
  %vm101 = vcmp.eq.s32.totalorder %v95, 1
  %vm102 = vcmp.eq.s32.totalorder %v98, 1
  %v103 = vsel %vm99, %v11, -3e+38
  %v104 = vsel %vm100, %v12, -3e+38
  %v105 = vsel %vm101, %v13, -3e+38
  %v106 = vsel %vm102, %v14, -3e+38
  %v107 = vsel %vm57, %v103, -inf
  %v108 = vsel %vm57, %v104, -inf
  %v109 = vsel %vm57, %v105, -inf
  %v110 = vsel %vm57, %v106, -inf
  %v111 = vmax.f32 %v107, %v108
  %v112 = vmax.f32 %v109, %v110
  %v113 = vmax.f32 %v111, %v112
  %v114 = vrot.slane %v113, 4
  %v115 = vmax.f32 %v113, %v114
  %v116 = vrot.slane %v115, 2
  %v117 = vmax.f32 %v115, %v116
  %v118 = vrot.slane %v117, 1
  %v119 = vmax.f32 %v117, %v118
  %vm120 = vcmp.gt.f32.partialorder %v32, 0.0
  %v121 = vsel %vm120, 1, 0
  %122 = vset.pattern.permute.xlu0 0
  %123 = vperm.xlu0 %122, %v121
  %v124 = vpop.permute.xlu0 %123
  %vm125 = vcmp.eq.s32.totalorder %v124, 1
  %v126 = vsel %vm125, %v119, 0.0
  %128 = vrot.lane.b32.xlu0 %v78, 64
  %v129 = vpop.permute.xlu0 %128
  %v131 = vsel %vm57, %v126, %v129
  %vm132 = vcmask 15368
  %v133 = vsel %vm132, %v15, 0.0
  %v134 = vsel %vm132, %v16, 0.0
  %v135 = vadd.f32 %v133, %v134
  %v136 = vsel %vm132, %v17, 0.0
  %v137 = vadd.f32 %v135, %v136
  %v138 = vsel %vm132, %v18, 0.0
  %v139 = vadd.f32 %v137, %v138
  %v140 = vrot.slane %v139, 4
  %v141 = vadd.f32 %v139, %v140
  %v142 = vrot.slane %v141, 2
  %v143 = vadd.f32 %v141, %v142
  %v144 = vrot.slane %v143, 1
  %v145 = vadd.f32 %v143, %v144
  %146 = vset.pattern.permute.xlu0 1
  %147 = vperm.xlu0 %146, %v15
  %v148 = vpop.permute.xlu0 %147
  %150 = vset.pattern.permute.xlu0 1
  %151 = vperm.xlu0 %150, %v16
  %v152 = vpop.permute.xlu0 %151
  %154 = vset.pattern.permute.xlu0 1
  %155 = vperm.xlu0 %154, %v17
  %v156 = vpop.permute.xlu0 %155
  %158 = vset.pattern.permute.xlu0 1
  %159 = vperm.xlu0 %158, %v18
  %v160 = vpop.permute.xlu0 %159
  %v162 = vmul.f32 %v148, %v11
  %v163 = vmul.f32 %v152, %v12
  %v164 = vmul.f32 %v156, %v13
  %v165 = vmul.f32 %v160, %v14
  %v166 = vsel %vm57, %v162, 0.0
  %v167 = vsel %vm57, %v163, 0.0
  %v168 = vadd.f32 %v166, %v167
  %v169 = vsel %vm57, %v164, 0.0
  %v170 = vadd.f32 %v168, %v169
  %v171 = vsel %vm57, %v165, 0.0
  %v172 = vadd.f32 %v170, %v171
  %v173 = vrot.slane %v172, 4
  %v174 = vadd.f32 %v172, %v173
  %v175 = vrot.slane %v174, 2
  %v176 = vadd.f32 %v174, %v175
  %v177 = vrot.slane %v176, 1
  %v178 = vadd.f32 %v176, %v177
  %v179 = vmax.f32 %v145, 1.0
  %v180 = vrcp.pop %v179
  %182 = vset.pattern.permute.xlu0 1
  %183 = vperm.xlu0 %182, %v180
  %v184 = vpop.permute.xlu0 %183
  %v186 = vmul.f32 %v178, %v184
  %187 = vset.pattern.permute.xlu0 1
  %188 = vperm.xlu0 %187, %v83
  %v189 = vpop.permute.xlu0 %188
  %190 = vset.pattern.permute.xlu0 1
  %191 = vperm.xlu0 %190, %v84
  %v192 = vpop.permute.xlu0 %191
  %193 = vset.pattern.permute.xlu0 1
  %194 = vperm.xlu0 %193, %v85
  %v195 = vpop.permute.xlu0 %194
  %196 = vset.pattern.permute.xlu0 1
  %197 = vperm.xlu0 %196, %v86
  %v198 = vpop.permute.xlu0 %197
  %vm199 = vcmp.eq.s32.totalorder %v189, 1
  %vm200 = vcmp.eq.s32.totalorder %v192, 1
  %vm201 = vcmp.eq.s32.totalorder %v195, 1
  %vm202 = vcmp.eq.s32.totalorder %v198, 1
  %v203 = vsel %vm199, %v11, -3e+38
  %v204 = vsel %vm200, %v12, -3e+38
  %v205 = vsel %vm201, %v13, -3e+38
  %v206 = vsel %vm202, %v14, -3e+38
  %v207 = vsel %vm57, %v203, -inf
  %v208 = vsel %vm57, %v204, -inf
  %v209 = vsel %vm57, %v205, -inf
  %v210 = vsel %vm57, %v206, -inf
  %v211 = vmax.f32 %v207, %v208
  %v212 = vmax.f32 %v209, %v210
  %v213 = vmax.f32 %v211, %v212
  %v214 = vrot.slane %v213, 4
  %v215 = vmax.f32 %v213, %v214
  %v216 = vrot.slane %v215, 2
  %v217 = vmax.f32 %v215, %v216
  %v218 = vrot.slane %v217, 1
  %v219 = vmax.f32 %v217, %v218
  %vm220 = vcmp.gt.f32.partialorder %v145, 0.0
  %v221 = vsel %vm220, 1, 0
  %222 = vset.pattern.permute.xlu0 1
  %223 = vperm.xlu0 %222, %v221
  %v224 = vpop.permute.xlu0 %223
  %vm225 = vcmp.eq.s32.totalorder %v224, 1
  %v226 = vsel %vm225, %v219, 0.0
  %228 = vrot.lane.b32.xlu0 %v186, 64
  %v229 = vpop.permute.xlu0 %228
  %v231 = vsel %vm57, %v226, %v229
  %v233 = vrot.slane %v231, 7
  %vm235 = vcmask 1040384
  %v236 = vsel %vm235, %v131, %v233
  %237 = vst [vmem:[%s2] sm:$0x3] %v236
  // Predicated region
  $region10: #{recognizer_spl_forward.28} parent=0 // pred_check
    _
  $region11: #{recognizer_spl_forward.28} parent=0 // pred_check_branch
    %239 = sbr.rel (0) target = $region13
  $region12: #{recognizer_spl_forward.28} parent=0 // pred_region
    _
  $region13: #{recognizer_spl_forward.28} parent=0 // pred_fallthru
    _
  // Predicated region
  $region14: #{recognizer_spl_forward.28} parent=0 // pred_check
    _
  $region15: #{recognizer_spl_forward.28} parent=0 // pred_check_branch
    %241 = sbr.rel (0) target = $region17
  $region16: #{recognizer_spl_forward.28} parent=0 // pred_region
    _
  $region17: #{recognizer_spl_forward.28} parent=0 // pred_fallthru
    _

// kernel: recognizer_spl_forward.33
$region0: #{recognizer_spl_forward.33}
  #allocation0 [shape = 'u32[]', space=smem, size = 0x4, offset = 0x4, fixed_abs, tag = 'smem constant byte address 0x4 - core index']
  #allocation1 [shape = 'u32[144,128]{1,0:T(1,128)}', space=vmem, size = 0x12000, scoped, tag = 'internal scratch']
  %s0 = inlined_call_operand.vmem [shape: f32[2,128], index: 0, kind: input, shape index: {}]
  %s1 = inlined_call_operand.vmem [shape: f32[2,128], index: 1, kind: input, shape index: {}]
  %s2 = inlined_call_operand.vmem [shape: f32[2,128], index: 2, kind: input, shape index: {}]
  %s3 = inlined_call_operand.vmem [shape: f32[2,128], index: 3, kind: input, shape index: {}]
  %s4 = inlined_call_operand.vmem [shape: f32[128,64], index: 4, kind: input, shape index: {}]
  %s5 = inlined_call_operand.vmem [shape: f32[1,64], index: 5, kind: input, shape index: {}]
  %s6 = inlined_call_operand.vmem [shape: f32[64,64], index: 6, kind: input, shape index: {}]
  %s7 = inlined_call_operand.vmem [shape: f32[1,64], index: 7, kind: input, shape index: {}]
  %s8 = inlined_call_operand.vmem [shape: f32[64,3], index: 8, kind: input, shape index: {}]
  %s9 = inlined_call_operand.vmem [shape: f32[1,3], index: 9, kind: input, shape index: {}]
  %s10 = inlined_call_operand.hbm [shape: f32[2,3], index: 10, kind: output, shape index: {}]
  %s11 = sld [smem:[#allocation0]]
  $region50: #{recognizer_spl_forward.33} parent=0
    _
  %s13 = ssub.s32 1, %s11
  %s14 = scalar_select 0, %s13, %s11
  $region1: #{recognizer_spl_forward.33} parent=0
    #allocation2 [shape = 'u8[1024]{0}', space=vmem, size = 0x400, scoped, tag = 'output window, operand 0, single buffered']
    #allocation3 [shape = 's32[1]{0}', space=sflag, size = 0x4, scoped, tag = 'scoped memory for recognizer_spl_forward.33']
    %15 = vsyncpa [#allocation3], 0
    // Predicated region
    $region2: #{recognizer_spl_forward.33} parent=1 // pred_check
      _
    $region3: #{recognizer_spl_forward.33} parent=1 // pred_check_branch
      %17 = sbr.rel (0) target = $region5
    $region4: #{recognizer_spl_forward.33} parent=1 // pred_region
      _
    $region5: #{recognizer_spl_forward.33} parent=1 // pred_fallthru
      _
    // Predicated region
    $region6: #{recognizer_spl_forward.33} parent=1 // pred_check
      _
    $region7: #{recognizer_spl_forward.33} parent=1 // pred_check_branch
      %19 = sbr.rel (0) target = $region9
    $region8: #{recognizer_spl_forward.33} parent=1 // pred_region
      _
    $region9: #{recognizer_spl_forward.33} parent=1 // pred_fallthru
      _
    // Predicated region
    $region10: #{recognizer_spl_forward.33} parent=1 // pred_check
      _
    $region11: #{recognizer_spl_forward.33} parent=1 // pred_check_branch
      %21 = sbr.rel (0) target = $region13
    $region12: #{recognizer_spl_forward.33} parent=1 // pred_region
      _
    $region13: #{recognizer_spl_forward.33} parent=1 // pred_fallthru
      _
    // Predicated region
    $region14: #{recognizer_spl_forward.33} parent=1 // pred_check
      _
    $region15: #{recognizer_spl_forward.33} parent=1 // pred_check_branch
      %23 = sbr.rel (0) target = $region17
    $region16: #{recognizer_spl_forward.33} parent=1 // pred_region
      _
    $region17: #{recognizer_spl_forward.33} parent=1 // pred_fallthru
      _
    // Predicated region
    $region18: #{recognizer_spl_forward.33} parent=1 // pred_check
      _
    $region19: #{recognizer_spl_forward.33} parent=1 // pred_check_branch
      %25 = sbr.rel (0) target = $region21
    $region20: #{recognizer_spl_forward.33} parent=1 // pred_region
      _
    $region21: #{recognizer_spl_forward.33} parent=1 // pred_fallthru
      _
    // Predicated region
    $region22: #{recognizer_spl_forward.33} parent=1 // pred_check
      _
    $region23: #{recognizer_spl_forward.33} parent=1 // pred_check_branch
      %27 = sbr.rel (0) target = $region25
    $region24: #{recognizer_spl_forward.33} parent=1 // pred_region
      _
    $region25: #{recognizer_spl_forward.33} parent=1 // pred_fallthru
      _
    // Predicated region
    $region26: #{recognizer_spl_forward.33} parent=1 // pred_check
      _
    $region27: #{recognizer_spl_forward.33} parent=1 // pred_check_branch
      %29 = sbr.rel (0) target = $region29
    $region28: #{recognizer_spl_forward.33} parent=1 // pred_region
      _
    $region29: #{recognizer_spl_forward.33} parent=1 // pred_fallthru
      _
    // Predicated region
    $region30: #{recognizer_spl_forward.33} parent=1 // pred_check
      _
    $region31: #{recognizer_spl_forward.33} parent=1 // pred_check_branch
      %31 = sbr.rel (0) target = $region33
    $region32: #{recognizer_spl_forward.33} parent=1 // pred_region
      _
    $region33: #{recognizer_spl_forward.33} parent=1 // pred_fallthru
      _
    // Predicated region
    $region34: #{recognizer_spl_forward.33} parent=1 // pred_check
      _
    $region35: #{recognizer_spl_forward.33} parent=1 // pred_check_branch
      %33 = sbr.rel (0) target = $region37
    $region36: #{recognizer_spl_forward.33} parent=1 // pred_region
      _
    $region37: #{recognizer_spl_forward.33} parent=1 // pred_fallthru
      _
    // Predicated region
    $region38: #{recognizer_spl_forward.33} parent=1 // pred_check
      _
    $region39: #{recognizer_spl_forward.33} parent=1 // pred_check_branch
      %35 = sbr.rel (0) target = $region41
    $region40: #{recognizer_spl_forward.33} parent=1 // pred_region
      _
    $region41: #{recognizer_spl_forward.33} parent=1 // pred_fallthru
      _
    %v36 = vld [vmem:[%s0] sm:$0x3]
    %v37 = vld [vmem:[%s1] sm:$0x3]
    %v38 = vadd.f32 %v36, %v37
    %v39 = vld [vmem:[%s2] sm:$0x3]
    %v40 = vadd.f32 %v38, %v39
    %v41 = vld [vmem:[%s3] sm:$0x3]
    %v42 = vadd.f32 %v40, %v41
    %v43 = vld [vmem:[%s4] sm:$0xff]
    %v44 = vld [vmem:[%s4 + $0x8] sm:$0xff]
    %v45 = vld [vmem:[%s4 + $0x10] sm:$0xff]
    %v46 = vld [vmem:[%s4 + $0x18] sm:$0xff]
    %v47 = vld [vmem:[%s4 + $0x20] sm:$0xff]
    %v48 = vld [vmem:[%s4 + $0x28] sm:$0xff]
    %v49 = vld [vmem:[%s4 + $0x30] sm:$0xff]
    %v50 = vld [vmem:[%s4 + $0x38] sm:$0xff]
    %v51 = vld [vmem:[%s4 + $0x40] sm:$0xff]
    %v52 = vld [vmem:[%s4 + $0x48] sm:$0xff]
    %v53 = vld [vmem:[%s4 + $0x50] sm:$0xff]
    %v54 = vld [vmem:[%s4 + $0x58] sm:$0xff]
    %v55 = vld [vmem:[%s4 + $0x60] sm:$0xff]
    %v56 = vld [vmem:[%s4 + $0x68] sm:$0xff]
    %v57 = vld [vmem:[%s4 + $0x70] sm:$0xff]
    %v58 = vld [vmem:[%s4 + $0x78] sm:$0xff]
    %v59 = vld [vmem:[%s5] sm:$0x1]
    %v61 = vlaneseq
    %v62 = vshrl.u32 %v61, 7
    %v63 = vsub.s32 0, %v62
    %v64 = vrot.slane %v59, %v63
    %66 = vmatprep.subr.mxu0 0.0
    %67 = vmatpush1.msra.mxu0 %v43
    %68 = vmatprep.subr.mxu0 0.0
    %69 = vmatpush1.msra.mxu0 %v44
    %70 = vmatprep.subr.mxu0 0.0
    %71 = vmatpush1.msra.mxu0 %v45
    %72 = vmatprep.subr.mxu0 0.0
    %73 = vmatpush1.msra.mxu0 %v46
    %74 = vmatprep.subr.mxu0 0.0
    %75 = vmatpush1.msra.mxu0 %v47
    %76 = vmatprep.subr.mxu0 0.0
    %77 = vmatpush1.msra.mxu0 %v48
    %78 = vmatprep.subr.mxu0 0.0
    %79 = vmatpush1.msra.mxu0 %v49
    %80 = vmatprep.subr.mxu0 0.0
    %81 = vmatpush1.msra.mxu0 %v50
    %82 = vmatprep.subr.mxu0 0.0
    %83 = vmatpush1.msra.mxu0 %v51
    %84 = vmatprep.subr.mxu0 0.0
    %85 = vmatpush1.msra.mxu0 %v52
    %86 = vmatprep.subr.mxu0 0.0
    %87 = vmatpush1.msra.mxu0 %v53
    %88 = vmatprep.subr.mxu0 0.0
    %89 = vmatpush1.msra.mxu0 %v54
    %90 = vmatprep.subr.mxu0 0.0
    %91 = vmatpush1.msra.mxu0 %v55
    %92 = vmatprep.subr.mxu0 0.0
    %93 = vmatpush1.msra.mxu0 %v56
    %94 = vmatprep.subr.mxu0 0.0
    %95 = vmatpush1.msra.mxu0 %v57
    %96 = vmatprep.subr.mxu0 0.0
    %97 = vmatpush1.msra.mxu0 %v58
    %98 = vmatprep.subr.mxu0 0.0
    %99 = vmatpush1.msra.mxu0 0.0
    %100 = vmatprep.subr.mxu0 0.0
    %101 = vmatpush1.msra.mxu0 0.0
    %102 = vmatprep.subr.mxu0 0.0
    %103 = vmatpush1.msra.mxu0 0.0
    %104 = vmatprep.subr.mxu0 0.0
    %105 = vmatpush1.msra.mxu0 0.0
    %106 = vmatprep.subr.mxu0 0.0
    %107 = vmatpush1.msra.mxu0 0.0
    %108 = vmatprep.subr.mxu0 0.0
    %109 = vmatpush1.msra.mxu0 0.0
    %110 = vmatprep.subr.mxu0 0.0
    %111 = vmatpush1.msra.mxu0 0.0
    %112 = vmatprep.subr.mxu0 0.0
    %113 = vmatpush1.msra.mxu0 0.0
    %114 = vmatprep.subr.mxu0 0.0
    %115 = vmatpush1.msra.mxu0 0.0
    %116 = vmatprep.subr.mxu0 0.0
    %117 = vmatpush1.msra.mxu0 0.0
    %118 = vmatprep.subr.mxu0 0.0
    %119 = vmatpush1.msra.mxu0 0.0
    %120 = vmatprep.subr.mxu0 0.0
    %121 = vmatpush1.msra.mxu0 0.0
    %122 = vmatprep.subr.mxu0 0.0
    %123 = vmatpush1.msra.mxu0 0.0
    %124 = vmatprep.subr.mxu0 0.0
    %125 = vmatpush1.msra.mxu0 0.0
    %126 = vmatprep.subr.mxu0 0.0
    %127 = vmatpush1.msra.mxu0 0.0
    %128 = vmatprep.subr.mxu0 0.0
    %129 = vmatpush1.msra.mxu0 0.0
    %130 = vmatprep.mubr.f32.mxu0 0.0
    %131 = vmatmul.mubr.f32.gmra.mrb[0].mxu0 %v42
    %v132 = vpop.f32.mrb[0].mxu0
    %v133 = vadd.f32 %v64, %v132
    %v134 = vpop.f32.mrb[0].mxu0
    %135 = vdwg.mxu0
    %v136 = vmul.f32 %v133, 0.5
    %v137 = vmul.f32 %v133, 0.044715
    %v138 = vmul.f32 %v137, %v133
    %v139 = vmul.f32 %v138, %v133
    %v140 = vadd.f32 %v133, %v139
    %v141 = vmul.f32 %v140, 0.7978846
    %v142 = vtanh.pop %v141
    %v143 = vadd.f32 %v142, 1.0
    %v144 = vmul.f32 %v136, %v143
    %v145 = vld [vmem:[%s6] sm:$0xff]
    %v146 = vld [vmem:[%s6 + $0x8] sm:$0xff]
    %v147 = vld [vmem:[%s6 + $0x10] sm:$0xff]
    %v148 = vld [vmem:[%s6 + $0x18] sm:$0xff]
    %v149 = vld [vmem:[%s6 + $0x20] sm:$0xff]
    %v150 = vld [vmem:[%s6 + $0x28] sm:$0xff]
    %v151 = vld [vmem:[%s6 + $0x30] sm:$0xff]
    %v152 = vld [vmem:[%s6 + $0x38] sm:$0xff]
    %v153 = vld [vmem:[%s7] sm:$0x1]
    %v155 = vlaneseq
    %v156 = vshrl.u32 %v155, 7
    %v157 = vsub.s32 0, %v156
    %v158 = vrot.slane %v153, %v157
    %vm160 = vcmask 523264
    %v162 = vsel %vm160, %v144, 0
    %164 = vmatprep.subr.mxu0 0.0
    %165 = vmatpush1.msra.mxu0 %v145
    %166 = vmatprep.subr.mxu0 0.0
    %167 = vmatpush1.msra.mxu0 %v146
    %168 = vmatprep.subr.mxu0 0.0
    %169 = vmatpush1.msra.mxu0 %v147
    %170 = vmatprep.subr.mxu0 0.0
    %171 = vmatpush1.msra.mxu0 %v148
    %172 = vmatprep.subr.mxu0 0.0
    %173 = vmatpush1.msra.mxu0 %v149
    %174 = vmatprep.subr.mxu0 0.0
    %175 = vmatpush1.msra.mxu0 %v150
    %176 = vmatprep.subr.mxu0 0.0
    %177 = vmatpush1.msra.mxu0 %v151
    %178 = vmatprep.subr.mxu0 0.0
    %179 = vmatpush1.msra.mxu0 %v152
    %180 = vmatprep.subr.mxu0 0.0
    %181 = vmatpush1.msra.mxu0 0.0
    %182 = vmatprep.subr.mxu0 0.0
    %183 = vmatpush1.msra.mxu0 0.0
    %184 = vmatprep.subr.mxu0 0.0
    %185 = vmatpush1.msra.mxu0 0.0
    %186 = vmatprep.subr.mxu0 0.0
    %187 = vmatpush1.msra.mxu0 0.0
    %188 = vmatprep.subr.mxu0 0.0
    %189 = vmatpush1.msra.mxu0 0.0
    %190 = vmatprep.subr.mxu0 0.0
    %191 = vmatpush1.msra.mxu0 0.0
    %192 = vmatprep.subr.mxu0 0.0
    %193 = vmatpush1.msra.mxu0 0.0
    %194 = vmatprep.subr.mxu0 0.0
    %195 = vmatpush1.msra.mxu0 0.0
    %196 = vmatprep.subr.mxu0 0.0
    %197 = vmatpush1.msra.mxu0 0.0
    %198 = vmatprep.subr.mxu0 0.0
    %199 = vmatpush1.msra.mxu0 0.0
    %200 = vmatprep.subr.mxu0 0.0
    %201 = vmatpush1.msra.mxu0 0.0
    %202 = vmatprep.subr.mxu0 0.0
    %203 = vmatpush1.msra.mxu0 0.0
    %204 = vmatprep.subr.mxu0 0.0
    %205 = vmatpush1.msra.mxu0 0.0
    %206 = vmatprep.subr.mxu0 0.0
    %207 = vmatpush1.msra.mxu0 0.0
    %208 = vmatprep.subr.mxu0 0.0
    %209 = vmatpush1.msra.mxu0 0.0
    %210 = vmatprep.subr.mxu0 0.0
    %211 = vmatpush1.msra.mxu0 0.0
    %212 = vmatprep.subr.mxu0 0.0
    %213 = vmatpush1.msra.mxu0 0.0
    %214 = vmatprep.subr.mxu0 0.0
    %215 = vmatpush1.msra.mxu0 0.0
    %216 = vmatprep.subr.mxu0 0.0
    %217 = vmatpush1.msra.mxu0 0.0
    %218 = vmatprep.subr.mxu0 0.0
    %219 = vmatpush1.msra.mxu0 0.0
    %220 = vmatprep.subr.mxu0 0.0
    %221 = vmatpush1.msra.mxu0 0.0
    %222 = vmatprep.subr.mxu0 0.0
    %223 = vmatpush1.msra.mxu0 0.0
    %224 = vmatprep.subr.mxu0 0.0
    %225 = vmatpush1.msra.mxu0 0.0
    %226 = vmatprep.subr.mxu0 0.0
    %227 = vmatpush1.msra.mxu0 0.0
    %228 = vmatprep.mubr.f32.mxu0 0.0
    %229 = vmatmul.mubr.f32.gmra.mrb[0].mxu0 %v162
    %v230 = vpop.f32.mrb[0].mxu0
    %v231 = vadd.f32 %v158, %v230
    %v232 = vpop.f32.mrb[0].mxu0
    %233 = vdwg.mxu0
    %v234 = vmul.f32 %v231, 0.5
    %v235 = vmul.f32 %v231, 0.044715
    %v236 = vmul.f32 %v235, %v231
    %v237 = vmul.f32 %v236, %v231
    %v238 = vadd.f32 %v231, %v237
    %v239 = vmul.f32 %v238, 0.7978846
    %v240 = vtanh.pop %v239
    %v241 = vadd.f32 %v240, 1.0
    %v242 = vmul.f32 %v234, %v241
    %v243 = vld [vmem:[%s8] sm:$0xff]
    %v244 = vld [vmem:[%s8 + $0x8] sm:$0xff]
    %v245 = vld [vmem:[%s8 + $0x10] sm:$0xff]
    %v246 = vld [vmem:[%s8 + $0x18] sm:$0xff]
    %v247 = vld [vmem:[%s8 + $0x20] sm:$0xff]
    %v248 = vld [vmem:[%s8 + $0x28] sm:$0xff]
    %v249 = vld [vmem:[%s8 + $0x30] sm:$0xff]
    %v250 = vld [vmem:[%s8 + $0x38] sm:$0xff]
    %v251 = vld [vmem:[%s9] sm:$0x1]
    %v253 = vlaneseq
    %v254 = vshrl.u32 %v253, 7
    %v255 = vsub.s32 0, %v254
    %v256 = vrot.slane %v251, %v255
    %v259 = vsel %vm160, %v242, 0
    %261 = vmatprep.subr.mxu0 0.0
    %262 = vmatpush1.msra.mxu0 %v243
    %263 = vmatprep.subr.mxu0 0.0
    %264 = vmatpush1.msra.mxu0 %v244
    %265 = vmatprep.subr.mxu0 0.0
    %266 = vmatpush1.msra.mxu0 %v245
    %267 = vmatprep.subr.mxu0 0.0
    %268 = vmatpush1.msra.mxu0 %v246
    %269 = vmatprep.subr.mxu0 0.0
    %270 = vmatpush1.msra.mxu0 %v247
    %271 = vmatprep.subr.mxu0 0.0
    %272 = vmatpush1.msra.mxu0 %v248
    %273 = vmatprep.subr.mxu0 0.0
    %274 = vmatpush1.msra.mxu0 %v249
    %275 = vmatprep.subr.mxu0 0.0
    %276 = vmatpush1.msra.mxu0 %v250
    %277 = vmatprep.subr.mxu0 0.0
    %278 = vmatpush1.msra.mxu0 0.0
    %279 = vmatprep.subr.mxu0 0.0
    %280 = vmatpush1.msra.mxu0 0.0
    %281 = vmatprep.subr.mxu0 0.0
    %282 = vmatpush1.msra.mxu0 0.0
    %283 = vmatprep.subr.mxu0 0.0
    %284 = vmatpush1.msra.mxu0 0.0
    %285 = vmatprep.subr.mxu0 0.0
    %286 = vmatpush1.msra.mxu0 0.0
    %287 = vmatprep.subr.mxu0 0.0
    %288 = vmatpush1.msra.mxu0 0.0
    %289 = vmatprep.subr.mxu0 0.0
    %290 = vmatpush1.msra.mxu0 0.0
    %291 = vmatprep.subr.mxu0 0.0
    %292 = vmatpush1.msra.mxu0 0.0
    %293 = vmatprep.subr.mxu0 0.0
    %294 = vmatpush1.msra.mxu0 0.0
    %295 = vmatprep.subr.mxu0 0.0
    %296 = vmatpush1.msra.mxu0 0.0
    %297 = vmatprep.subr.mxu0 0.0
    %298 = vmatpush1.msra.mxu0 0.0
    %299 = vmatprep.subr.mxu0 0.0
    %300 = vmatpush1.msra.mxu0 0.0
    %301 = vmatprep.subr.mxu0 0.0
    %302 = vmatpush1.msra.mxu0 0.0
    %303 = vmatprep.subr.mxu0 0.0
    %304 = vmatpush1.msra.mxu0 0.0
    %305 = vmatprep.subr.mxu0 0.0
    %306 = vmatpush1.msra.mxu0 0.0
    %307 = vmatprep.subr.mxu0 0.0
    %308 = vmatpush1.msra.mxu0 0.0
    %309 = vmatprep.subr.mxu0 0.0
    %310 = vmatpush1.msra.mxu0 0.0
    %311 = vmatprep.subr.mxu0 0.0
    %312 = vmatpush1.msra.mxu0 0.0
    %313 = vmatprep.subr.mxu0 0.0
    %314 = vmatpush1.msra.mxu0 0.0
    %315 = vmatprep.subr.mxu0 0.0
    %316 = vmatpush1.msra.mxu0 0.0
    %317 = vmatprep.subr.mxu0 0.0
    %318 = vmatpush1.msra.mxu0 0.0
    %319 = vmatprep.subr.mxu0 0.0
    %320 = vmatpush1.msra.mxu0 0.0
    %321 = vmatprep.subr.mxu0 0.0
    %322 = vmatpush1.msra.mxu0 0.0
    %323 = vmatprep.subr.mxu0 0.0
    %324 = vmatpush1.msra.mxu0 0.0
    %325 = vmatprep.mubr.f32.mxu0 0.0
    %326 = vmatmul.mubr.f32.gmra.mrb[0].mxu0 %v259
    %v327 = vpop.f32.mrb[0].mxu0
    %v328 = vadd.f32 %v256, %v327
    %v329 = vpop.f32.mrb[0].mxu0
    %330 = vdwg.mxu0
    %vm331 = vcmask 17408
    %332 = vst.msk [vmem:[#allocation2] sm:$0x3] %vm331, %v328
    // Predicated region
    $region42: #{recognizer_spl_forward.33} parent=1 // pred_check
      _
    $region43: #{recognizer_spl_forward.33} parent=1 // pred_check_branch
      %334 = sbr.rel (0) target = $region45
    $region44: #{recognizer_spl_forward.33} parent=1 // pred_region
      %s336 = ssub.s32 32, 32
      %337 = vsyncadd [#allocation3], %s336
      %s339 = sshll.u32 [#allocation2], 4
      %s340 = int_to_ptr.vmem [resolvable:$true] %s339
      %342 = dma.vmem_to_hbm [thread:$0]  %s340, 32, %s10, [#allocation3]
    $region45: #{recognizer_spl_forward.33} parent=1 // pred_fallthru
      _
    // Predicated region
    $region46: #{recognizer_spl_forward.33} parent=1 // pred_check
      _
    $region47: #{recognizer_spl_forward.33} parent=1 // pred_check_branch
      %344 = sbr.rel (0) target = $region49
    $region48: #{recognizer_spl_forward.33} parent=1 // pred_region
      %345 = dma.done [#allocation3], 32
    $region49: #{recognizer_spl_forward.33} parent=1 // pred_fallthru
      _
    %346 = vsyncpa [#allocation3], 1

</llo_original>
